<compile_context>
chip_gen: v6e
topology: v6e:2x2x1
jax: 0.10.0
libtpu: 0.0.40
codegen_flags: <defaults>
</compile_context>

<pallas_src>
import jax
import jax.numpy as jnp
from jax.experimental import pallas as pl
from jax.experimental.pallas import tpu as pltpu


def _make_self_attention_kernel(compute_dtype, approx_recip, n_valid, n_pad, tk):
    """Kernel factory.

    compute_dtype : MXU input dtype (bf16 fast path / f32 verification path).
    n_valid       : number of real (unpadded) spatial positions.
    n_pad         : padded spatial size (multiple of 128).
    tk            : key-tile width (needed to build the key-padding mask).
    """
    # A[m, k] @ B[k, n]  (contract lhs dim 1 with rhs dim 0).
    contract_std = (((1,), (0,)), ((), ()))
    # Contract the (small) head dim, which is dim 0 of both operands.
    contract_head = (((0,), (0,)), ((), ()))
    mm_prec = (jax.lax.Precision.HIGHEST if compute_dtype == jnp.float32
               else jax.lax.Precision.DEFAULT)
    masked = (n_pad != n_valid)

    def kernel(xq_ref, k_ref, v_ref, wq_ref, bq_ref, gamma_ref, o_ref,
               q_sc, m_sc, l_sc, acc_sc):
        ki = pl.program_id(2)
        nk = pl.num_programs(2)

        x_q = xq_ref[0]                                   # [C, TQ] (input dtype)

        @pl.when(ki == 0)
        def _init():
            # Q projection once per (batch, query tile):
            #   q[d, i] = sum_c Wq[d, c] * x[c, i] + bq[d]   -> [C8, TQ]
            q = jax.lax.dot_general(wq_ref[...], x_q.astype(compute_dtype),
                                    contract_std, precision=mm_prec,
                                    preferred_element_type=jnp.float32)
            q_sc[...] = (q + bq_ref[...]).astype(q_sc.dtype)
            m_sc[...] = jnp.full_like(m_sc, -jnp.inf)
            l_sc[...] = jnp.zeros_like(l_sc)
            acc_sc[...] = jnp.zeros_like(acc_sc)

        k = k_ref[0]                                      # [C8, TK] compute_dtype
        v = v_ref[0]                                      # [C,  TK] compute_dtype

        # Transposed energy tile: e_t[j, i] = <k_j, q_i> -> [TK, TQ]
        # (keys on sublanes, queries on lanes; no explicit transpose materialized)
        e_t = jax.lax.dot_general(k, q_sc[...], contract_head,
                                  precision=mm_prec,
                                  preferred_element_type=jnp.float32)

        if masked:
            # Mask padded key positions so they contribute nothing to softmax.
            pos = ki * tk + jax.lax.broadcasted_iota(jnp.int32, e_t.shape, 0)
            e_t = jnp.where(pos < n_valid, e_t, jnp.float32(-1e30))

        # Online softmax over the key axis (axis 0); accumulators in f32.
        m_prev = m_sc[...]                                             # [1, TQ]
        m_new = jnp.maximum(m_prev, jnp.max(e_t, axis=0, keepdims=True))
        alpha = jnp.exp(m_prev - m_new)                                # [1, TQ]
        p_t = jnp.exp(e_t - m_new)                                     # [TK, TQ]
        l_sc[...] = alpha * l_sc[...] + jnp.sum(p_t, axis=0, keepdims=True)
        # Unnormalized PV: [C, TK] @ [TK, TQ] -> [C, TQ]
        pv = jax.lax.dot_general(v, p_t.astype(compute_dtype), contract_std,
                                 precision=mm_prec,
                                 preferred_element_type=jnp.float32)
        acc_sc[...] = alpha * acc_sc[...] + pv
        m_sc[...] = m_new

        @pl.when(ki == nk - 1)
        def _finalize():
            inv_l = pl.reciprocal(l_sc[...], approx=approx_recip)      # [1, TQ]
            out = acc_sc[...] * inv_l                                  # [C, TQ]
            gamma = gamma_ref[0]
            o_ref[0] = (gamma * out + x_q.astype(jnp.float32)).astype(o_ref.dtype)

    return kernel


def _pick_tiles(n_pad, batch):
    """Tile defaults: 256-wide when possible (fills v6e/v7x 256-deep MXU)."""
    def pick(candidates):
        for t in candidates:
            if n_pad % t == 0:
                return t
        return n_pad
    tk = pick((256, 128))
    tq = pick((256, 128))
    # v7x has 2 TensorCores: keep at least 2 units of "parallel" grid work.
    if batch == 1 and tq > 128 and (n_pad // tq) < 2:
        tq = 128
    return tq, tk


def self_attention_pallas(x_nchw, wq, bq, wk, bk, wv, bv, gamma,
                          *, tq=None, tk=None, compute_dtype=jnp.bfloat16):
    """SAGAN self-attention forward.

    x_nchw : [B, C, H, W]   (same layout the PyTorch module consumes)
    wq, wk : [C//8, C]      1x1 conv weights, torch layout [C_out, C_in]
    wv     : [C, C]
    bq, bk : [C//8], bv: [C]   conv biases
    gamma  : scalar
    """
    B, C, H, W = x_nchw.shape
    C8 = wq.shape[0]
    N = H * W

    # NCHW -> [B, C, N] is a pure reshape: no HBM transpose round-trip.
    x = x_nchw.reshape(B, C, N)

    # Pad spatial size up to a multiple of 128 so every output store is a
    # full-lane (lane-dense) vst. Padded key columns are masked in the kernel;
    # padded query columns are sliced off below.
    n_pad = -(-N // 128) * 128
    if n_pad != N:
        x = jnp.pad(x, ((0, 0), (0, 0), (0, n_pad - N)))

    auto_tq, auto_tk = _pick_tiles(n_pad, B)
    tq = auto_tq if tq is None else tq
    tk = auto_tk if tk is None else tk
    assert n_pad % tq == 0 and n_pad % tk == 0, "padded spatial size must tile"
    nq, nk = n_pad // tq, n_pad // tk

    prec = (jax.lax.Precision.HIGHEST if compute_dtype == jnp.float32
            else jax.lax.Precision.DEFAULT)

    # Hoisted K / V projections: computed ONCE per batch element here (instead
    # of once per (query tile, key tile) inside the kernel) and streamed to the
    # kernel as compute_dtype (bf16) tiles.
    x_c = x.astype(compute_dtype)
    k_all = (jnp.einsum('dc,bcn->bdn', wk.astype(compute_dtype), x_c,
                        precision=prec, preferred_element_type=jnp.float32)
             + bk.astype(jnp.float32)[None, :, None]).astype(compute_dtype)
    v_all = (jnp.einsum('dc,bcn->bdn', wv.astype(compute_dtype), x_c,
                        precision=prec, preferred_element_type=jnp.float32)
             + bv.astype(jnp.float32)[None, :, None]).astype(compute_dtype)

    wq_c = wq.astype(compute_dtype)
    bq2 = bq.reshape(C8, 1).astype(jnp.float32)
    gamma1 = jnp.asarray(gamma, jnp.float32).reshape(1)

    kernel = _make_self_attention_kernel(
        compute_dtype, approx_recip=(compute_dtype != jnp.float32),
        n_valid=N, n_pad=n_pad, tk=tk)

    out = pl.pallas_call(
        kernel,
        out_shape=jax.ShapeDtypeStruct((B, C, n_pad), x.dtype),
        grid_spec=pltpu.PrefetchScalarGridSpec(
            num_scalar_prefetch=0,
            grid=(B, nq, nk),
            in_specs=[
                pl.BlockSpec((1, C, tq), lambda b, qi, ki: (b, 0, qi)),   # x query tile + residual (f32)
                pl.BlockSpec((1, C8, tk), lambda b, qi, ki: (b, 0, ki)),  # K tile (bf16)
                pl.BlockSpec((1, C, tk), lambda b, qi, ki: (b, 0, ki)),   # V tile (bf16)
                pl.BlockSpec((C8, C), lambda b, qi, ki: (0, 0)),          # Wq (resident, tiny)
                pl.BlockSpec((C8, 1), lambda b, qi, ki: (0, 0)),          # bq
                pl.BlockSpec(memory_space=pltpu.MemorySpace.SMEM),        # gamma (scalar)
            ],
            out_specs=pl.BlockSpec((1, C, tq), lambda b, qi, ki: (b, 0, qi)),
            scratch_shapes=[
                pltpu.VMEM((C8, tq), compute_dtype),   # q tile
                pltpu.VMEM((1, tq), jnp.float32),      # running max (m)
                pltpu.VMEM((1, tq), jnp.float32),      # running sum (l)
                pltpu.VMEM((C, tq), jnp.float32),      # output accumulator
            ],
        ),
        compiler_params=pltpu.CompilerParams(
            dimension_semantics=("parallel", "parallel", "arbitrary"),
            vmem_limit_bytes=48 * 1024 * 1024),
    )(x, k_all, v_all, wq_c, bq2, gamma1)

    if n_pad != N:
        out = out[:, :, :N]
    return out.reshape(B, C, H, W)


def self_attention_ref(x_nchw, wq, bq, wk, bk, wv, bv, gamma):
    """Pure-JAX full-f32 reference mirroring the PyTorch forward exactly."""
    B, C, H, W = x_nchw.shape
    N = H * W
    hp = jax.lax.Precision.HIGHEST
    xf = x_nchw.reshape(B, C, N)                                      # [B, C, N]
    q = jnp.einsum('dc,bcn->bdn', wq, xf, precision=hp) + bq[None, :, None]
    k = jnp.einsum('dc,bcn->bdn', wk, xf, precision=hp) + bk[None, :, None]
    v = jnp.einsum('dc,bcn->bdn', wv, xf, precision=hp) + bv[None, :, None]
    energy = jnp.einsum('bdi,bdj->bij', q, k, precision=hp)           # [B, N, N]
    attn = jax.nn.softmax(energy, axis=-1)
    out = jnp.einsum('bcj,bij->bci', v, attn, precision=hp)           # [B, C, N]
    return gamma * out.reshape(B, C, H, W) + x_nchw


if __name__ == "__main__":
    def run_case(B, C, H, W):
        C8 = C // 8
        key = jax.random.PRNGKey(0)
        kx, kq, kk, kv, kbq, kbk, kbv = jax.random.split(key, 7)

        x = jax.random.normal(kx, (B, C, H, W), jnp.float32)
        # 1x1 conv weights in torch layout [C_out, C_in] (kernel dims squeezed).
        # The module inits gamma to 0; use a nonzero deterministic value so the
        # attention path actually contributes to the check.
        wq = jax.random.normal(kq, (C8, C), jnp.float32) * 0.1
        wk = jax.random.normal(kk, (C8, C), jnp.float32) * 0.1
        wv = jax.random.normal(kv, (C, C), jnp.float32) * 0.1
        bq = jax.random.normal(kbq, (C8,), jnp.float32) * 0.1
        bk = jax.random.normal(kbk, (C8,), jnp.float32) * 0.1
        bv = jax.random.normal(kbv, (C,), jnp.float32) * 0.1
        gamma = jnp.float32(0.5)

        ref = self_attention_ref(x, wq, bq, wk, bk, wv, bv, gamma)

        # Default fast path: bf16 MXU inputs, f32 accumulation/softmax/residual.
        out_bf16 = jax.block_until_ready(
            self_attention_pallas(x, wq, bq, wk, bk, wv, bv, gamma))
        assert out_bf16.shape == (B, C, H, W)
        assert jnp.allclose(out_bf16, ref, atol=5e-2, rtol=5e-2), (
            f"bf16-path mismatch ({B},{C},{H},{W}), max abs err = "
            f"{float(jnp.max(jnp.abs(out_bf16 - ref)))}")

        # Strict check: full-f32 matmul path must match the reference tightly.
        out_f32 = jax.block_until_ready(
            self_attention_pallas(x, wq, bq, wk, bk, wv, bv, gamma,
                                  compute_dtype=jnp.float32))
        assert jnp.allclose(out_f32, ref, atol=2e-3, rtol=2e-3), (
            f"f32-path mismatch ({B},{C},{H},{W}), max abs err = "
            f"{float(jnp.max(jnp.abs(out_f32 - ref)))}")

    # N = 256: 256-wide tiles, no padding, B*nq = 2 parallel units.
    run_case(B=2, C=64, H=16, W=16)
    # N = 100 -> padded to 128: exercises the key-padding mask + output slice.
    run_case(B=1, C=64, H=10, W=10)

    print("KERNEL_OK")
</pallas_src>

<mosaic_0001>
module attributes {stable_mosaic.version = 11 : i64} {
  func.func @kernel(%arg0: i32, %arg1: i32, %arg2: i32, %arg3: memref<1x64x256xf32, #tpu.memory_space<vmem>>, %arg4: memref<1x8x256xbf16, #tpu.memory_space<vmem>>, %arg5: memref<1x64x256xbf16, #tpu.memory_space<vmem>>, %arg6: memref<8x64xbf16, #tpu.memory_space<vmem>>, %arg7: memref<8x1xf32, #tpu.memory_space<vmem>>, %arg8: memref<1xf32, #tpu.memory_space<smem>>, %arg9: memref<1x64x256xf32, #tpu.memory_space<vmem>>, %arg10: memref<8x256xbf16, #tpu.memory_space<vmem>>, %arg11: memref<1x256xf32, #tpu.memory_space<vmem>>, %arg12: memref<1x256xf32, #tpu.memory_space<vmem>>, %arg13: memref<64x256xf32, #tpu.memory_space<vmem>>) attributes {dimension_semantics = [#tpu.dimension_semantics<parallel>, #tpu.dimension_semantics<parallel>, #tpu.dimension_semantics<arbitrary>], iteration_bounds = array<i64: 2, 1, 1>, scalar_prefetch = 0 : i64, scratch_operands = 4 : i64, tpu.core_type = #tpu.core_type<tc>, window_params = [{transform_indices = @transform_0, window_bounds = array<i64: 1, 64, 256>}, {transform_indices = @transform_1, window_bounds = array<i64: 1, 8, 256>}, {transform_indices = @transform_2, window_bounds = array<i64: 1, 64, 256>}, {pipeline_mode = #tpu.pipeline_mode<synchronous>, transform_indices = @transform_3, window_bounds = array<i64: 8, 64>}, {pipeline_mode = #tpu.pipeline_mode<synchronous>, transform_indices = @transform_4, window_bounds = array<i64: 8, 1>}, {transform_indices = @transform_5, window_bounds = array<i64: 1>}, {transform_indices = @transform_6, window_bounds = array<i64: 1, 64, 256>}]} {
    %c0 = arith.constant 0 : index
    %c0_0 = arith.constant 0 : index
    %c0_1 = arith.constant 0 : index
    %0 = vector.load %arg3[%c0, %c0_0, %c0_1] : memref<1x64x256xf32, #tpu.memory_space<vmem>>, vector<1x64x256xf32>
    %1 = vector.shape_cast %0 : vector<1x64x256xf32> to vector<64x256xf32>
    %c0_i32 = arith.constant 0 : i32
    %2 = arith.cmpi eq, %arg2, %c0_i32 : i32
    %3 = arith.extui %2 : i1 to i32
    %c0_i32_2 = arith.constant 0 : i32
    %4 = arith.cmpi ne, %3, %c0_i32_2 : i32
    scf.if %4 {
      %c0_28 = arith.constant 0 : index
      %c0_29 = arith.constant 0 : index
      %37 = vector.load %arg6[%c0_28, %c0_29] : memref<8x64xbf16, #tpu.memory_space<vmem>>, vector<8x64xbf16>
      %38 = arith.truncf %1 : vector<64x256xf32> to vector<64x256xbf16>
      %cst_30 = arith.constant dense<0.000000e+00> : vector<8x256xf32>
      %39 = tpu.matmul %37, %38, %cst_30 {dimension_numbers = #tpu.dot_dimension_numbers<[1], [0], [0], [1], [0, 0, 1, 1], [], []>} : vector<8x64xbf16>, vector<64x256xbf16>, vector<8x256xf32> -> vector<8x256xf32>
      %c0_31 = arith.constant 0 : index
      %c0_32 = arith.constant 0 : index
      %40 = vector.load %arg7[%c0_31, %c0_32] : memref<8x1xf32, #tpu.memory_space<vmem>>, vector<8x1xf32>
      %41 = vector.broadcast %40 : vector<8x1xf32> to vector<8x256xf32>
      %42 = arith.addf %39, %41 : vector<8x256xf32>
      %43 = arith.truncf %42 : vector<8x256xf32> to vector<8x256xbf16>
      %c0_33 = arith.constant 0 : index
      %c0_34 = arith.constant 0 : index
      %44 = vector.load %arg10[%c0_33, %c0_34] : memref<8x256xbf16, #tpu.memory_space<vmem>>, vector<8x256xbf16>
      tpu.vector_store %arg10[%c0_33, %c0_34], %43 {strides = array<i32>} : memref<8x256xbf16, #tpu.memory_space<vmem>>, vector<8x256xbf16>,
      %cst_35 = arith.constant 0xFF800000 : f32
      %45 = vector.broadcast %cst_35 : f32 to vector<1x256xf32>
      %c0_36 = arith.constant 0 : index
      %c0_37 = arith.constant 0 : index
      %46 = vector.load %arg11[%c0_36, %c0_37] : memref<1x256xf32, #tpu.memory_space<vmem>>, vector<1x256xf32>
      tpu.vector_store %arg11[%c0_36, %c0_37], %45 {strides = array<i32>} : memref<1x256xf32, #tpu.memory_space<vmem>>, vector<1x256xf32>,
      %cst_38 = arith.constant 0.000000e+00 : f32
      %47 = vector.broadcast %cst_38 : f32 to vector<1x256xf32>
      %c0_39 = arith.constant 0 : index
      %c0_40 = arith.constant 0 : index
      %48 = vector.load %arg12[%c0_39, %c0_40] : memref<1x256xf32, #tpu.memory_space<vmem>>, vector<1x256xf32>
      tpu.vector_store %arg12[%c0_39, %c0_40], %47 {strides = array<i32>} : memref<1x256xf32, #tpu.memory_space<vmem>>, vector<1x256xf32>,
      %cst_41 = arith.constant 0.000000e+00 : f32
      %49 = vector.broadcast %cst_41 : f32 to vector<64x256xf32>
      %c0_42 = arith.constant 0 : index
      %c0_43 = arith.constant 0 : index
      %50 = vector.load %arg13[%c0_42, %c0_43] : memref<64x256xf32, #tpu.memory_space<vmem>>, vector<64x256xf32>
      tpu.vector_store %arg13[%c0_42, %c0_43], %49 {strides = array<i32>} : memref<64x256xf32, #tpu.memory_space<vmem>>, vector<64x256xf32>,
    } else {
    }
    %c0_3 = arith.constant 0 : index
    %c0_4 = arith.constant 0 : index
    %c0_5 = arith.constant 0 : index
    %5 = vector.load %arg4[%c0_3, %c0_4, %c0_5] : memref<1x8x256xbf16, #tpu.memory_space<vmem>>, vector<1x8x256xbf16>
    %6 = vector.shape_cast %5 : vector<1x8x256xbf16> to vector<8x256xbf16>
    %c0_6 = arith.constant 0 : index
    %c0_7 = arith.constant 0 : index
    %c0_8 = arith.constant 0 : index
    %7 = vector.load %arg5[%c0_6, %c0_7, %c0_8] : memref<1x64x256xbf16, #tpu.memory_space<vmem>>, vector<1x64x256xbf16>
    %8 = vector.shape_cast %7 : vector<1x64x256xbf16> to vector<64x256xbf16>
    %c0_9 = arith.constant 0 : index
    %c0_10 = arith.constant 0 : index
    %9 = vector.load %arg10[%c0_9, %c0_10] : memref<8x256xbf16, #tpu.memory_space<vmem>>, vector<8x256xbf16>
    %cst = arith.constant dense<0.000000e+00> : vector<256x256xf32>
    %10 = tpu.matmul %6, %9, %cst {dimension_numbers = #tpu.dot_dimension_numbers<[0], [0], [1], [1], [0, 1, 1, 1], [], []>} : vector<8x256xbf16>, vector<8x256xbf16>, vector<256x256xf32> -> vector<256x256xf32>
    %c0_11 = arith.constant 0 : index
    %c0_12 = arith.constant 0 : index
    %11 = vector.load %arg11[%c0_11, %c0_12] : memref<1x256xf32, #tpu.memory_space<vmem>>, vector<1x256xf32>
    %cst_13 = arith.constant dense<0xFF800000> : vector<256xf32>
    %12 = vector.multi_reduction <maximumf>, %10, %cst_13 [0] : vector<256x256xf32> to vector<256xf32>
    %13 = vector.shape_cast %12 : vector<256xf32> to vector<1x256xf32>
    %14 = arith.maximumf %11, %13 : vector<1x256xf32>
    %15 = arith.subf %11, %14 : vector<1x256xf32>
    %16 = math.exp %15 : vector<1x256xf32>
    %17 = vector.broadcast %14 : vector<1x256xf32> to vector<256x256xf32>
    %18 = arith.subf %10, %17 : vector<256x256xf32>
    %19 = math.exp %18 : vector<256x256xf32>
    %c0_14 = arith.constant 0 : index
    %c0_15 = arith.constant 0 : index
    %20 = vector.load %arg12[%c0_14, %c0_15] : memref<1x256xf32, #tpu.memory_space<vmem>>, vector<1x256xf32>
    %21 = arith.mulf %16, %20 : vector<1x256xf32>
    %cst_16 = arith.constant dense<0.000000e+00> : vector<256xf32>
    %22 = vector.multi_reduction <add>, %19, %cst_16 [0] : vector<256x256xf32> to vector<256xf32>
    %23 = vector.shape_cast %22 : vector<256xf32> to vector<1x256xf32>
    %24 = arith.addf %21, %23 : vector<1x256xf32>
    %c0_17 = arith.constant 0 : index
    %c0_18 = arith.constant 0 : index
    %25 = vector.load %arg12[%c0_17, %c0_18] : memref<1x256xf32, #tpu.memory_space<vmem>>, vector<1x256xf32>
    tpu.vector_store %arg12[%c0_17, %c0_18], %24 {strides = array<i32>} : memref<1x256xf32, #tpu.memory_space<vmem>>, vector<1x256xf32>,
    %26 = arith.truncf %19 : vector<256x256xf32> to vector<256x256xbf16>
    %cst_19 = arith.constant dense<0.000000e+00> : vector<64x256xf32>
    %27 = tpu.matmul %8, %26, %cst_19 {dimension_numbers = #tpu.dot_dimension_numbers<[1], [0], [0], [1], [0, 0, 1, 1], [], []>} : vector<64x256xbf16>, vector<256x256xbf16>, vector<64x256xf32> -> vector<64x256xf32>
    %c0_20 = arith.constant 0 : index
    %c0_21 = arith.constant 0 : index
    %28 = vector.load %arg13[%c0_20, %c0_21] : memref<64x256xf32, #tpu.memory_space<vmem>>, vector<64x256xf32>
    %29 = vector.broadcast %16 : vector<1x256xf32> to vector<64x256xf32>
    %30 = arith.mulf %29, %28 : vector<64x256xf32>
    %31 = arith.addf %30, %27 : vector<64x256xf32>
    %c0_22 = arith.constant 0 : index
    %c0_23 = arith.constant 0 : index
    %32 = vector.load %arg13[%c0_22, %c0_23] : memref<64x256xf32, #tpu.memory_space<vmem>>, vector<64x256xf32>
    tpu.vector_store %arg13[%c0_22, %c0_23], %31 {strides = array<i32>} : memref<64x256xf32, #tpu.memory_space<vmem>>, vector<64x256xf32>,
    %c0_24 = arith.constant 0 : index
    %c0_25 = arith.constant 0 : index
    %33 = vector.load %arg11[%c0_24, %c0_25] : memref<1x256xf32, #tpu.memory_space<vmem>>, vector<1x256xf32>
    tpu.vector_store %arg11[%c0_24, %c0_25], %14 {strides = array<i32>} : memref<1x256xf32, #tpu.memory_space<vmem>>, vector<1x256xf32>,
    %c0_i32_26 = arith.constant 0 : i32
    %34 = arith.cmpi eq, %arg2, %c0_i32_26 : i32
    %35 = arith.extui %34 : i1 to i32
    %c0_i32_27 = arith.constant 0 : i32
    %36 = arith.cmpi ne, %35, %c0_i32_27 : i32
    scf.if %36 {
      %c0_28 = arith.constant 0 : index
      %c0_29 = arith.constant 0 : index
      %37 = vector.load %arg12[%c0_28, %c0_29] : memref<1x256xf32, #tpu.memory_space<vmem>>, vector<1x256xf32>
      %38 = tpu.reciprocal %37 {approx = true} : vector<1x256xf32> -> vector<1x256xf32>
      %c0_30 = arith.constant 0 : index
      %c0_31 = arith.constant 0 : index
      %39 = vector.load %arg13[%c0_30, %c0_31] : memref<64x256xf32, #tpu.memory_space<vmem>>, vector<64x256xf32>
      %40 = vector.broadcast %38 : vector<1x256xf32> to vector<64x256xf32>
      %41 = arith.mulf %39, %40 : vector<64x256xf32>
      %c0_32 = arith.constant 0 : index
      %42 = memref.load %arg8[%c0_32] : memref<1xf32, #tpu.memory_space<smem>>
      %43 = vector.broadcast %42 : f32 to vector<64x256xf32>
      %44 = arith.mulf %43, %41 : vector<64x256xf32>
      %45 = arith.addf %44, %1 : vector<64x256xf32>
      %c0_33 = arith.constant 0 : index
      %c0_34 = arith.constant 0 : index
      %c0_35 = arith.constant 0 : index
      %46 = vector.load %arg9[%c0_33, %c0_34, %c0_35] : memref<1x64x256xf32, #tpu.memory_space<vmem>>, vector<1x64x256xf32>
      %47 = vector.shape_cast %46 : vector<1x64x256xf32> to vector<64x256xf32>
      %48 = vector.shape_cast %45 : vector<64x256xf32> to vector<1x64x256xf32>
      tpu.vector_store %arg9[%c0_33, %c0_34, %c0_35], %48 {strides = array<i32>} : memref<1x64x256xf32, #tpu.memory_space<vmem>>, vector<1x64x256xf32>,
    } else {
    }
    return
  }
  func.func @transform_0(%arg0: i32, %arg1: i32, %arg2: i32) -> (i32, i32, i32) {
    %c0_i32 = arith.constant 0 : i32
    %c0_i32_0 = arith.constant 0 : i32
    return %arg0, %c0_i32, %arg1 : i32, i32, i32
  }
  func.func @transform_1(%arg0: i32, %arg1: i32, %arg2: i32) -> (i32, i32, i32) {
    %c0_i32 = arith.constant 0 : i32
    %c0_i32_0 = arith.constant 0 : i32
    return %arg0, %c0_i32, %arg2 : i32, i32, i32
  }
  func.func @transform_2(%arg0: i32, %arg1: i32, %arg2: i32) -> (i32, i32, i32) {
    %c0_i32 = arith.constant 0 : i32
    %c0_i32_0 = arith.constant 0 : i32
    return %arg0, %c0_i32, %arg2 : i32, i32, i32
  }
  func.func @transform_3(%arg0: i32, %arg1: i32, %arg2: i32) -> (i32, i32) {
    %c0_i32 = arith.constant 0 : i32
    %c0_i32_0 = arith.constant 0 : i32
    %c0_i32_1 = arith.constant 0 : i32
    return %c0_i32, %c0_i32_0 : i32, i32
  }
  func.func @transform_4(%arg0: i32, %arg1: i32, %arg2: i32) -> (i32, i32) {
    %c0_i32 = arith.constant 0 : i32
    %c0_i32_0 = arith.constant 0 : i32
    %c0_i32_1 = arith.constant 0 : i32
    return %c0_i32, %c0_i32_0 : i32, i32
  }
  func.func @transform_5(%arg0: i32, %arg1: i32, %arg2: i32) -> i32 {
    %c0_i32 = arith.constant 0 : i32
    %c0_i32_0 = arith.constant 0 : i32
    return %c0_i32 : i32
  }
  func.func @transform_6(%arg0: i32, %arg1: i32, %arg2: i32) -> (i32, i32, i32) {
    %c0_i32 = arith.constant 0 : i32
    %c0_i32_0 = arith.constant 0 : i32
    return %arg0, %c0_i32, %arg1 : i32, i32, i32
  }
}

</mosaic_0001>

<llo_original>
// kernel: tpu_custom_call.1
$region0: #{tpu_custom_call.1}
  #allocation0 [shape = 'u32[]', space=smem, size = 0x4, offset = 0x4, fixed_abs, tag = 'smem constant byte address 0x4 - core index']
  #allocation1 [shape = 'u32[144,128]{1,0:T(1,128)}', space=vmem, size = 0x12000, scoped, tag = 'internal scratch']
  #allocation2 [shape = 'bf16[8,256]{1,0:T(8,128)(2,1)}', space=vmem, size = 0x1000, scoped, tag = 'scratch operand']
  #allocation3 [shape = 'f32[1,256]{1,0:T(1,128)}', space=vmem, size = 0x400, scoped, tag = 'scratch operand']
  #allocation4 [shape = 'f32[1,256]{1,0:T(1,128)}', space=vmem, size = 0x400, scoped, tag = 'scratch operand']
  #allocation5 [shape = 'f32[64,256]{1,0:T(8,128)}', space=vmem, size = 0x10000, scoped, tag = 'scratch operand']
  #allocation6 [shape = 'f32[1]{0:T(128)S(6)}', space=smem, size = 0x200, scoped, tag = 'scoped memory for tpu_custom_call.1']
  %s0 = inlined_call_operand.hbm [shape: f32[2,64,256], index: 0, kind: input, shape index: {}]
  %s1 = inlined_call_operand.hbm [shape: bf16[2,8,256], index: 1, kind: input, shape index: {}]
  %s2 = inlined_call_operand.hbm [shape: bf16[2,64,256], index: 2, kind: input, shape index: {}]
  %s3 = inlined_call_operand.vmem [shape: bf16[8,64], index: 3, kind: input, shape index: {}]
  %s4 = inlined_call_operand.vmem [shape: f32[8,1], index: 4, kind: input, shape index: {}]
  %s5 = inlined_call_operand.<no memory space> [shape: f32[1], index: 5, kind: input, shape index: {}]
  %s6 = inlined_call_operand.hbm [shape: f32[2,64,256], index: 6, kind: output, shape index: {}]
  %s7 = sld [smem:[#allocation0]]
  $region77: #{tpu_custom_call.1} parent=0
    _
  %s9 = ssub.s32 1, %s7
  %s10 = scalar_select 0, %s9, %s7
  %11 = sst [smem:[#allocation6]] %s5
  $region1: #{tpu_custom_call.1} parent=0
    #allocation7 [shape = 'u8[131072]{0}', space=vmem, size = 0x20000, scoped, tag = 'input window, operand 0']
    #allocation8 [shape = 's32[2]{0}', space=sflag, size = 0x8, scoped, tag = 'scoped memory for tpu_custom_call.1']
    #allocation9 [shape = 's32[2]{0}', space=sflag, size = 0x8, scoped, tag = 'scoped memory for tpu_custom_call.1']
    #allocation10 [shape = 'u8[8192]{0}', space=vmem, size = 0x2000, scoped, tag = 'input window, operand 1']
    #allocation11 [shape = 's32[2]{0}', space=sflag, size = 0x8, scoped, tag = 'scoped memory for tpu_custom_call.1']
    #allocation12 [shape = 'u8[65536]{0}', space=vmem, size = 0x10000, scoped, tag = 'input window, operand 2']
    #allocation13 [shape = 'u8[131072]{0}', space=vmem, size = 0x20000, scoped, tag = 'output window, operand 0']
    %12 = vsyncpa [#allocation8], 0
    %s13 = scalar_lea.sflag [#allocation8], 1
    %14 = vsyncpa %s13, 0
    %15 = vsyncpa [#allocation11], 0
    %s16 = scalar_lea.sflag [#allocation11], 1
    %17 = vsyncpa %s16, 0
    %18 = vsyncpa [#allocation9], 0
    %s19 = scalar_lea.sflag [#allocation9], 1
    %20 = vsyncpa %s19, 0
    loop: start=0, step=1, limit=4
    $region2: #{tpu_custom_call.1} parent=1 // loop_pre_header
      _
    $region3: #{tpu_custom_call.1} parent=1 // loop_header
      %s22 = sphi 0, %s26
      %p23 = scmp.ge.s32.totalorder %s22, 4
      %s29 = sphi 0, %s48
      %s30 = sphi 0, %s44
      %s31 = sphi 0, %s40
      %s32 = sphi 0, %s29
      %s33 = sphi 0, %s30
      %s34 = sphi 0, %s31
      %s35 = sphi 0, %s32
      %s36 = sphi 0, %s33
      %s37 = sphi 0, %s34
      %s53 = sphi 0, %s55
      %s56 = sphi 0, %s53
      %s57 = sphi 0, %s56
      %s73 = sphi 0, %s57
      %s81 = sphi 0, %s83
      %s84 = sphi 0, %s81
      %s85 = sphi 0, %s84
      %s101 = sphi 0, %s85
      %s109 = sphi 0, %s111
      %s112 = sphi 0, %s109
      %s113 = sphi 0, %s112
      %s129 = sphi 0, %s113
      %s133 = sphi 0, %s133
      %s135 = sphi 0, %s133
      %s136 = sphi 0, %s135
      %s150 = sphi 0, %s136
      %s154 = sphi 0, %s154
      %s156 = sphi 0, %s154
      %s157 = sphi 0, %s156
      %s171 = sphi 0, %s157
      %s175 = sphi 0, %s175
      %s177 = sphi 0, %s175
      %s178 = sphi 0, %s177
      %s192 = sphi 0, %s178
      %s200 = sphi 0, %s202
      %s203 = sphi 0, %s200
      %s204 = sphi 0, %s203
      %s220 = sphi 0, %s204
    $region4: #{tpu_custom_call.1} parent=1 // loop_header_branch
      %25 = sbr.rel (%p23) target = $region8
    $region5: #{tpu_custom_call.1} parent=1 // loop_body
      %s27 = ssub.s32 %s22, 1
      %s28 = ssub.s32 %s22, 2
      %s38 = sadd.s32 1, %s31
      %p39 = scmp.ge.s32.totalorder %s38, 1
      %s40 = scalar_select %p39, 0, %s38
      %s41 = sadd.s32 1, %s30
      %s42 = scalar_select %p39, %s41, %s30
      %p43 = scmp.ge.s32.totalorder %s42, 1
      %s44 = scalar_select %p43, 0, %s42
      %s45 = sadd.s32 1, %s29
      %s46 = scalar_select %p43, %s45, %s29
      %p47 = scmp.ge.s32.totalorder %s46, 2
      %s48 = scalar_select %p47, 0, %s46
      %s49 = ssub.s32 %s29, %s48
      %s50 = ssub.s32 %s30, %s44
      %s51 = sor.u32 %s49, %s50
      %p52 = scmp.eq.s32.totalorder %s51, 0
      %s54 = sadd.s32 %s53, 1
      %s55 = scalar_select %p52, %s53, %s54
      %p58 = pneg %p52
      %p59 = scmp.eq.s32.totalorder %s22, 1
      %p60 = por %p58, %p59
      %p61 = scmp.ne.s32.totalorder %s53, %s56
      %p62 = scmp.eq.s32.totalorder %s22, 0
      %p63 = por %p61, %p62
      %p64 = scmp.ne.s32.totalorder %s53, %s56
      %p65 = scmp.eq.s32.totalorder %s27, 1
      %p66 = por %p64, %p65
      %p67 = scmp.ne.s32.totalorder %s56, %s57
      %p68 = scmp.eq.s32.totalorder %s27, 0
      %p69 = por %p67, %p68
      %p70 = scmp.ne.s32.totalorder %s56, %s57
      %p71 = scmp.eq.s32.totalorder %s28, 1
      %p72 = por %p70, %p71
      %p74 = scmp.ne.s32.totalorder %s57, %s73
      %p75 = scmp.eq.s32.totalorder %s28, 0
      %p76 = por %p74, %p75
      %s77 = ssub.s32 %s29, %s48
      %s78 = ssub.s32 %s31, %s40
      %s79 = sor.u32 %s77, %s78
      %p80 = scmp.eq.s32.totalorder %s79, 0
      %s82 = sadd.s32 %s81, 1
      %s83 = scalar_select %p80, %s81, %s82
      %p86 = pneg %p80
      %p87 = scmp.eq.s32.totalorder %s22, 1
      %p88 = por %p86, %p87
      %p89 = scmp.ne.s32.totalorder %s81, %s84
      %p90 = scmp.eq.s32.totalorder %s22, 0
      %p91 = por %p89, %p90
      %p92 = scmp.ne.s32.totalorder %s81, %s84
      %p93 = scmp.eq.s32.totalorder %s27, 1
      %p94 = por %p92, %p93
      %p95 = scmp.ne.s32.totalorder %s84, %s85
      %p96 = scmp.eq.s32.totalorder %s27, 0
      %p97 = por %p95, %p96
      %p98 = scmp.ne.s32.totalorder %s84, %s85
      %p99 = scmp.eq.s32.totalorder %s28, 1
      %p100 = por %p98, %p99
      %p102 = scmp.ne.s32.totalorder %s85, %s101
      %p103 = scmp.eq.s32.totalorder %s28, 0
      %p104 = por %p102, %p103
      %s105 = ssub.s32 %s29, %s48
      %s106 = ssub.s32 %s31, %s40
      %s107 = sor.u32 %s105, %s106
      %p108 = scmp.eq.s32.totalorder %s107, 0
      %s110 = sadd.s32 %s109, 1
      %s111 = scalar_select %p108, %s109, %s110
      %p114 = pneg %p108
      %p115 = scmp.eq.s32.totalorder %s22, 1
      %p116 = por %p114, %p115
      %p117 = scmp.ne.s32.totalorder %s109, %s112
      %p118 = scmp.eq.s32.totalorder %s22, 0
      %p119 = por %p117, %p118
      %p120 = scmp.ne.s32.totalorder %s109, %s112
      %p121 = scmp.eq.s32.totalorder %s27, 1
      %p122 = por %p120, %p121
      %p123 = scmp.ne.s32.totalorder %s112, %s113
      %p124 = scmp.eq.s32.totalorder %s27, 0
      %p125 = por %p123, %p124
      %p126 = scmp.ne.s32.totalorder %s112, %s113
      %p127 = scmp.eq.s32.totalorder %s28, 1
      %p128 = por %p126, %p127
      %p130 = scmp.ne.s32.totalorder %s113, %s129
      %p131 = scmp.eq.s32.totalorder %s28, 0
      %p132 = por %p130, %p131
      %s134 = sadd.s32 %s133, 1
      %p137 = scmp.eq.s32.totalorder %s22, 1
      %p138 = scmp.ne.s32.totalorder %s133, %s135
      %p139 = scmp.eq.s32.totalorder %s22, 0
      %p140 = por %p138, %p139
      %p141 = scmp.ne.s32.totalorder %s133, %s135
      %p142 = scmp.eq.s32.totalorder %s27, 1
      %p143 = por %p141, %p142
      %p144 = scmp.ne.s32.totalorder %s135, %s136
      %p145 = scmp.eq.s32.totalorder %s27, 0
      %p146 = por %p144, %p145
      %p147 = scmp.ne.s32.totalorder %s135, %s136
      %p148 = scmp.eq.s32.totalorder %s28, 1
      %p149 = por %p147, %p148
      %p151 = scmp.ne.s32.totalorder %s136, %s150
      %p152 = scmp.eq.s32.totalorder %s28, 0
      %p153 = por %p151, %p152
      %s155 = sadd.s32 %s154, 1
      %p158 = scmp.eq.s32.totalorder %s22, 1
      %p159 = scmp.ne.s32.totalorder %s154, %s156
      %p160 = scmp.eq.s32.totalorder %s22, 0
      %p161 = por %p159, %p160
      %p162 = scmp.ne.s32.totalorder %s154, %s156
      %p163 = scmp.eq.s32.totalorder %s27, 1
      %p164 = por %p162, %p163
      %p165 = scmp.ne.s32.totalorder %s156, %s157
      %p166 = scmp.eq.s32.totalorder %s27, 0
      %p167 = por %p165, %p166
      %p168 = scmp.ne.s32.totalorder %s156, %s157
      %p169 = scmp.eq.s32.totalorder %s28, 1
      %p170 = por %p168, %p169
      %p172 = scmp.ne.s32.totalorder %s157, %s171
      %p173 = scmp.eq.s32.totalorder %s28, 0
      %p174 = por %p172, %p173
      %s176 = sadd.s32 %s175, 1
      %p179 = scmp.eq.s32.totalorder %s22, 1
      %p180 = scmp.ne.s32.totalorder %s175, %s177
      %p181 = scmp.eq.s32.totalorder %s22, 0
      %p182 = por %p180, %p181
      %p183 = scmp.ne.s32.totalorder %s175, %s177
      %p184 = scmp.eq.s32.totalorder %s27, 1
      %p185 = por %p183, %p184
      %p186 = scmp.ne.s32.totalorder %s177, %s178
      %p187 = scmp.eq.s32.totalorder %s27, 0
      %p188 = por %p186, %p187
      %p189 = scmp.ne.s32.totalorder %s177, %s178
      %p190 = scmp.eq.s32.totalorder %s28, 1
      %p191 = por %p189, %p190
      %p193 = scmp.ne.s32.totalorder %s178, %s192
      %p194 = scmp.eq.s32.totalorder %s28, 0
      %p195 = por %p193, %p194
      %s196 = ssub.s32 %s29, %s48
      %s197 = ssub.s32 %s30, %s44
      %s198 = sor.u32 %s196, %s197
      %p199 = scmp.eq.s32.totalorder %s198, 0
      %s201 = sadd.s32 %s200, 1
      %s202 = scalar_select %p199, %s200, %s201
      %p205 = pneg %p199
      %p206 = scmp.eq.s32.totalorder %s22, 1
      %p207 = por %p205, %p206
      %p208 = scmp.ne.s32.totalorder %s200, %s203
      %p209 = scmp.eq.s32.totalorder %s22, 0
      %p210 = por %p208, %p209
      %p211 = scmp.ne.s32.totalorder %s200, %s203
      %p212 = scmp.eq.s32.totalorder %s27, 1
      %p213 = por %p211, %p212
      %p214 = scmp.ne.s32.totalorder %s203, %s204
      %p215 = scmp.eq.s32.totalorder %s27, 0
      %p216 = por %p214, %p215
      %p217 = scmp.ne.s32.totalorder %s203, %s204
      %p218 = scmp.eq.s32.totalorder %s28, 1
      %p219 = por %p217, %p218
      %p221 = scmp.ne.s32.totalorder %s204, %s220
      %p222 = scmp.eq.s32.totalorder %s28, 0
      %p223 = por %p221, %p222
      %p224 = scmp.le.s32.totalorder 1, %s22
      %p225 = scmp.lt.s32.totalorder %s22, 3
      %p226 = pnand %p224, %p225
      %p227 = pneg %p226
      // Predicated region
      $region9: #{tpu_custom_call.1} parent=5 // pred_check
        _
      $region10: #{tpu_custom_call.1} parent=5 // pred_check_branch
        %229 = sbr.rel (%p226) target = $region12
      $region11: #{tpu_custom_call.1} parent=5 // pred_region
        %s230 = ssub.s32 %s22, 1
        // Predicated region
        $region13: #{tpu_custom_call.1} parent=11 // pred_check
          %p231 = pneg %p146
        $region14: #{tpu_custom_call.1} parent=11 // pred_check_branch
          %233 = sbr.rel (%p231) target = $region16
        $region15: #{tpu_custom_call.1} parent=11 // pred_region
          _
        $region16: #{tpu_custom_call.1} parent=11 // pred_fallthru
          _
        // Predicated region
        $region17: #{tpu_custom_call.1} parent=11 // pred_check
          %p234 = pneg %p167
        $region18: #{tpu_custom_call.1} parent=11 // pred_check_branch
          %236 = sbr.rel (%p234) target = $region20
        $region19: #{tpu_custom_call.1} parent=11 // pred_region
          _
        $region20: #{tpu_custom_call.1} parent=11 // pred_fallthru
          _
        // Predicated region
        $region21: #{tpu_custom_call.1} parent=11 // pred_check
          %p237 = pneg %p188
        $region22: #{tpu_custom_call.1} parent=11 // pred_check_branch
          %239 = sbr.rel (%p237) target = $region24
        $region23: #{tpu_custom_call.1} parent=11 // pred_region
          _
        $region24: #{tpu_custom_call.1} parent=11 // pred_fallthru
          _
      $region12: #{tpu_custom_call.1} parent=5 // pred_fallthru
        _
      %p240 = scmp.lt.s32.totalorder %s22, 2
      // Predicated region
      $region25: #{tpu_custom_call.1} parent=5 // pred_check
        %p241 = pneg %p240
      $region26: #{tpu_custom_call.1} parent=5 // pred_check_branch
        %243 = sbr.rel (%p241) target = $region28
      $region27: #{tpu_custom_call.1} parent=5 // pred_region
        // Predicated region
        $region29: #{tpu_custom_call.1} parent=27 // pred_check
          %p244 = pneg %p63
        $region30: #{tpu_custom_call.1} parent=27 // pred_check_branch
          %246 = sbr.rel (%p244) target = $region32
        $region31: #{tpu_custom_call.1} parent=27 // pred_region
          %s247 = sand.u32 %s53, 1
          %s248 = scalar_lea.sflag [#allocation8], %s247
          %s249 = sand.u32 %s53, 1
          %s250 = smul.addr %s249, 128
          %s251 = scalar_lea.vmem [#allocation7], %s250
          %s252 = smul.u32 2, %s30
          %s254 = ssub.s32 2048, 2048
          %255 = vsyncadd %s248, %s254
          %s256 = smul.addr %s29, 16
          %s257 = sadd.s32 %s252, %s256
          %s258 = smul.addr %s257, 128
          %s259 = scalar_lea.hbm %s0, %s258
          %s260 = sshll.u32 %s251, 4
          %s261 = int_to_ptr.vmem [resolvable:$true] %s260
          %266 = dma.hbm_to_vmem [thread:$0]  %s259, 2048, %s261, %s248, 256, 256, 16
        $region32: #{tpu_custom_call.1} parent=27 // pred_fallthru
          _
        // Predicated region
        $region33: #{tpu_custom_call.1} parent=27 // pred_check
          %p267 = pneg %p91
        $region34: #{tpu_custom_call.1} parent=27 // pred_check_branch
          %269 = sbr.rel (%p267) target = $region36
        $region35: #{tpu_custom_call.1} parent=27 // pred_region
          %s270 = sand.u32 %s22, 1
          %s271 = scalar_lea.sflag [#allocation11], %s270
          %s272 = sand.u32 %s81, 1
          %s273 = smul.addr %s272, 8
          %s274 = scalar_lea.vmem [#allocation10], %s273
          %s275 = smul.u32 2, %s31
          %s277 = ssub.s32 128, 128
          %278 = vsyncadd %s271, %s277
          %s279 = smul.addr %s29, 2
          %s280 = sadd.s32 %s275, %s279
          %s281 = smul.addr %s280, 64
          %s282 = scalar_lea.hbm %s1, %s281
          %s284 = sshll.u32 %s274, 4
          %s285 = int_to_ptr.vmem [resolvable:$true] %s284
          %287 = dma.hbm_to_vmem [thread:$0]  %s282, 128, %s285, %s271
        $region36: #{tpu_custom_call.1} parent=27 // pred_fallthru
          _
        // Predicated region
        $region37: #{tpu_custom_call.1} parent=27 // pred_check
          %p288 = pneg %p119
        $region38: #{tpu_custom_call.1} parent=27 // pred_check_branch
          %290 = sbr.rel (%p288) target = $region40
        $region39: #{tpu_custom_call.1} parent=27 // pred_region
          %s291 = sand.u32 %s22, 1
          %s292 = scalar_lea.sflag [#allocation11], %s291
          %s293 = sand.u32 %s109, 1
          %s294 = smul.addr %s293, 64
          %s295 = scalar_lea.vmem [#allocation12], %s294
          %s296 = smul.u32 2, %s31
          %s298 = ssub.s32 1024, 1024
          %299 = vsyncadd %s292, %s298
          %s300 = smul.addr %s29, 16
          %s301 = sadd.s32 %s296, %s300
          %s302 = smul.addr %s301, 64
          %s303 = scalar_lea.hbm %s2, %s302
          %s304 = sshll.u32 %s295, 4
          %s305 = int_to_ptr.vmem [resolvable:$true] %s304
          %310 = dma.hbm_to_vmem [thread:$0]  %s303, 1024, %s305, %s292, 128, 128, 8
        $region40: #{tpu_custom_call.1} parent=27 // pred_fallthru
          _
      $region28: #{tpu_custom_call.1} parent=5 // pred_fallthru
        _
      %p311 = scmp.le.s32.totalorder 1, %s22
      %p312 = scmp.lt.s32.totalorder %s22, 3
      %p313 = pnand %p311, %p312
      %p314 = pneg %p313
      // Predicated region
      $region41: #{tpu_custom_call.1} parent=5 // pred_check
        _
      $region42: #{tpu_custom_call.1} parent=5 // pred_check_branch
        %316 = sbr.rel (%p313) target = $region44
      $region43: #{tpu_custom_call.1} parent=5 // pred_region
        %s317 = ssub.s32 %s22, 1
        %s318 = sand.u32 %s56, 1
        %s319 = scalar_lea.sflag [#allocation8], %s318
        %s320 = sand.u32 %s56, 1
        %s321 = smul.addr %s320, 128
        %s322 = scalar_lea.vmem [#allocation7], %s321
        // Predicated region
        $region45: #{tpu_custom_call.1} parent=43 // pred_check
          %p323 = pneg %p69
        $region46: #{tpu_custom_call.1} parent=43 // pred_check_branch
          %325 = sbr.rel (%p323) target = $region48
        $region47: #{tpu_custom_call.1} parent=43 // pred_region
          %326 = dma.done %s319, 2048
        $region48: #{tpu_custom_call.1} parent=43 // pred_fallthru
          _
        %s327 = sand.u32 %s27, 1
        %s328 = scalar_lea.sflag [#allocation11], %s327
        %s329 = sand.u32 %s84, 1
        %s330 = smul.addr %s329, 8
        %s331 = scalar_lea.vmem [#allocation10], %s330
        // Predicated region
        $region49: #{tpu_custom_call.1} parent=43 // pred_check
          %p332 = pneg %p97
        $region50: #{tpu_custom_call.1} parent=43 // pred_check_branch
          %334 = sbr.rel (%p332) target = $region52
        $region51: #{tpu_custom_call.1} parent=43 // pred_region
          %335 = dma.done %s328, 128
        $region52: #{tpu_custom_call.1} parent=43 // pred_fallthru
          _
        %s336 = sand.u32 %s27, 1
        %s337 = scalar_lea.sflag [#allocation11], %s336
        %s338 = sand.u32 %s112, 1
        %s339 = smul.addr %s338, 64
        %s340 = scalar_lea.vmem [#allocation12], %s339
        // Predicated region
        $region53: #{tpu_custom_call.1} parent=43 // pred_check
          %p341 = pneg %p125
        $region54: #{tpu_custom_call.1} parent=43 // pred_check_branch
          %343 = sbr.rel (%p341) target = $region56
        $region55: #{tpu_custom_call.1} parent=43 // pred_region
          %344 = dma.done %s337, 1024
        $region56: #{tpu_custom_call.1} parent=43 // pred_fallthru
          _
        %s345 = sand.u32 %s56, 1
        %s346 = scalar_lea.sflag [#allocation8], %s345
        %s347 = sand.u32 %s56, 1
        %s348 = smul.addr %s347, 128
        %s349 = scalar_lea.vmem [#allocation7], %s348
        %p350 = pneg %p69
        %p351 = pneg %p66
        %s352 = sand.u32 %s27, 1
        %s353 = scalar_lea.sflag [#allocation11], %s352
        %s354 = sand.u32 %s84, 1
        %s355 = smul.addr %s354, 8
        %s356 = scalar_lea.vmem [#allocation10], %s355
        %p357 = pneg %p97
        %p358 = pneg %p94
        %s359 = sand.u32 %s27, 1
        %s360 = scalar_lea.sflag [#allocation11], %s359
        %s361 = sand.u32 %s112, 1
        %s362 = smul.addr %s361, 64
        %s363 = scalar_lea.vmem [#allocation12], %s362
        %p364 = pneg %p125
        %p365 = pneg %p122
        %p366 = pneg %p146
        %p367 = pneg %p143
        %p368 = pneg %p167
        %p369 = pneg %p164
        %p370 = pneg %p188
        %p371 = pneg %p185
        %p372 = pneg %p216
        %p373 = pneg %p213
        %s374 = sand.u32 %s203, 1
        %s375 = scalar_lea.sflag [#allocation9], %s374
        %s376 = sand.u32 %s203, 1
        %s377 = smul.addr %s376, 128
        %s378 = scalar_lea.vmem [#allocation13], %s377
        %s379 = smul.u32 2, %s33
        %s380 = smul.u32 2, %s34
        %s381 = smul.u32 2, %s34
        %s382 = smul.u32 2, %s33
        %v384 = vld [vmem:[%s322] sm:$0xff]
        %v385 = vld [vmem:[%s322 + $0x8] sm:$0xff]
        %v386 = vld [vmem:[%s322 + $0x10] sm:$0xff]
        %v387 = vld [vmem:[%s322 + $0x18] sm:$0xff]
        %v388 = vld [vmem:[%s322 + $0x20] sm:$0xff]
        %v389 = vld [vmem:[%s322 + $0x28] sm:$0xff]
        %v390 = vld [vmem:[%s322 + $0x30] sm:$0xff]
        %v391 = vld [vmem:[%s322 + $0x38] sm:$0xff]
        %v392 = vld [vmem:[%s322 + $0x40] sm:$0xff]
        %v393 = vld [vmem:[%s322 + $0x48] sm:$0xff]
        %v394 = vld [vmem:[%s322 + $0x50] sm:$0xff]
        %v395 = vld [vmem:[%s322 + $0x58] sm:$0xff]
        %v396 = vld [vmem:[%s322 + $0x60] sm:$0xff]
        %v397 = vld [vmem:[%s322 + $0x68] sm:$0xff]
        %v398 = vld [vmem:[%s322 + $0x70] sm:$0xff]
        %v399 = vld [vmem:[%s322 + $0x78] sm:$0xff]
        %p400 = scmp.eq.s32.totalorder %s34, 0
        // Predicated region
        $region57: #{tpu_custom_call.1} parent=43 // pred_check
          %p401 = pneg %p400
        $region58: #{tpu_custom_call.1} parent=43 // pred_check_branch
          %403 = sbr.rel (%p401) target = $region60
        $region59: #{tpu_custom_call.1} parent=43 // pred_region
          %v404 = vld [vmem:[%s3] sm:$0xf]
          %v405 = vpack.c.bf16 %v386, %v384
          %v406 = vpack.c.bf16 %v387, %v385
          %v407 = vpack.c.bf16 %v390, %v388
          %v408 = vpack.c.bf16 %v391, %v389
          %v409 = vpack.c.bf16 %v394, %v392
          %v410 = vpack.c.bf16 %v395, %v393
          %v411 = vpack.c.bf16 %v398, %v396
          %v412 = vpack.c.bf16 %v399, %v397
          %v413 = vld [vmem:[%s4] sm:$0xff]
          %415 = vset.pattern.permute.xlu0 0
          %416 = vperm.xlu0 %415, %v413
          %v417 = vpop.permute.xlu0 %416
          %vm419 = vcmask 523264
          %v421 = vsel %vm419, %v404, 0
          %423 = vmatprep.subr.bf16.mxu0 0
          %424 = vmatpush1.bf16.msra.mxu0 0
          %425 = vmatprep.subr.bf16.mxu0 0
          %426 = vmatpush1.bf16.msra.mxu0 0
          %427 = vmatprep.subr.bf16.mxu0 0
          %428 = vmatpush1.bf16.msra.mxu0 0
          %429 = vmatprep.subr.bf16.mxu0 0
          %430 = vmatpush1.bf16.msra.mxu0 0
          %431 = vmatprep.subr.bf16.mxu0 %v412
          %432 = vmatpush1.bf16.msra.mxu0 %v411
          %433 = vmatprep.subr.bf16.mxu0 %v410
          %434 = vmatpush1.bf16.msra.mxu0 %v409
          %435 = vmatprep.subr.bf16.mxu0 %v408
          %436 = vmatpush1.bf16.msra.mxu0 %v407
          %437 = vmatprep.subr.bf16.mxu0 %v406
          %438 = vmatpush1.bf16.msra.mxu0 %v405
          %439 = vmatprep.subr.bf16.mxu0 0
          %440 = vmatpush2.bf16.msra.mxu0 0
          %441 = vmatprep.subr.bf16.mxu0 0
          %442 = vmatpush2.bf16.msra.mxu0 0
          %443 = vmatprep.subr.bf16.mxu0 0
          %444 = vmatpush2.bf16.msra.mxu0 0
          %445 = vmatprep.subr.bf16.mxu0 0
          %446 = vmatpush2.bf16.msra.mxu0 0
          %447 = vmatprep.subr.bf16.mxu0 0
          %448 = vmatpush2.bf16.msra.mxu0 0
          %449 = vmatprep.subr.bf16.mxu0 0
          %450 = vmatpush2.bf16.msra.mxu0 0
          %451 = vmatprep.subr.bf16.mxu0 0
          %452 = vmatpush2.bf16.msra.mxu0 0
          %453 = vmatprep.subr.bf16.mxu0 0
          %454 = vmatpush2.bf16.msra.mxu0 0
          %455 = vmatprep.mubr.bf16.mxu0 0
          %456 = vmatmul.mubr.bf16.gmra.mxu0 %v421
          %v457 = vpop.f32.mrf.mxu0
          %v458 = vadd.f32 %v417, %v457
          %v459 = vpop.f32.mrf.mxu0
          %v460 = vadd.f32 %v417, %v459
          %v461 = vpop.f32.mrf.mxu0
          %v462 = vpop.f32.mrf.mxu0
          %463 = vdwg.mxu0
          %v464 = vpack.c.bf16 %v458, %v458
          %v465 = vpack.c.bf16 %v460, %v460
          %v468 = vunpack.c.l.b16 %v464
          %v469 = vunpack.c.l.b16 %v465
          %v470 = vpack.c.b16 %v469, %v468
          %472 = vst [vmem:[#allocation2] sm:$0xff] %v470
          %v473 = vlaneseq
          %vm474 = vcmp.ge.s32.totalorder %v473, 0
          %vm475 = vcmp.lt.s32.totalorder %v473, 256
          %vm476 = vmand %vm474, %vm475
          %477 = vst.msk [vmem:[#allocation3] sm:$0x3] %vm476, -inf
          %478 = vst.msk [vmem:[#allocation4] sm:$0x3] %vm476, 0.0
          %479 = vst [vmem:[#allocation5] sm:$0xff] 0.0
          %480 = vst [vmem:[#allocation5 + $0x8] sm:$0xff] 0.0
          %481 = vst [vmem:[#allocation5 + $0x10] sm:$0xff] 0.0
          %482 = vst [vmem:[#allocation5 + $0x18] sm:$0xff] 0.0
          %483 = vst [vmem:[#allocation5 + $0x20] sm:$0xff] 0.0
          %484 = vst [vmem:[#allocation5 + $0x28] sm:$0xff] 0.0
          %485 = vst [vmem:[#allocation5 + $0x30] sm:$0xff] 0.0
          %486 = vst [vmem:[#allocation5 + $0x38] sm:$0xff] 0.0
          %487 = vst [vmem:[#allocation5 + $0x40] sm:$0xff] 0.0
          %488 = vst [vmem:[#allocation5 + $0x48] sm:$0xff] 0.0
          %489 = vst [vmem:[#allocation5 + $0x50] sm:$0xff] 0.0
          %490 = vst [vmem:[#allocation5 + $0x58] sm:$0xff] 0.0
          %491 = vst [vmem:[#allocation5 + $0x60] sm:$0xff] 0.0
          %492 = vst [vmem:[#allocation5 + $0x68] sm:$0xff] 0.0
          %493 = vst [vmem:[#allocation5 + $0x70] sm:$0xff] 0.0
          %494 = vst [vmem:[#allocation5 + $0x78] sm:$0xff] 0.0
        $region60: #{tpu_custom_call.1} parent=43 // pred_fallthru
          _
        %v495 = vld [vmem:[%s331] sm:$0xff]
        %v496 = vld [vmem:[%s340] sm:$0xff]
        %v497 = vld [vmem:[%s340 + $0x8] sm:$0xff]
        %v498 = vld [vmem:[%s340 + $0x10] sm:$0xff]
        %v499 = vld [vmem:[%s340 + $0x18] sm:$0xff]
        %v500 = vld [vmem:[%s340 + $0x20] sm:$0xff]
        %v501 = vld [vmem:[%s340 + $0x28] sm:$0xff]
        %v502 = vld [vmem:[%s340 + $0x30] sm:$0xff]
        %v503 = vld [vmem:[%s340 + $0x38] sm:$0xff]
        %v504 = vld [vmem:[#allocation2] sm:$0xff]
        %v506 = vunpack.c.l.b16 %v495
        %v507 = vunpack.c.h.b16 %v495
        %v508 = vpack.c.b16 %v506, %v506
        %v509 = vpack.c.b16 %v507, %v507
        %512 = vxpose.xlu0.c.b16.start [1/8] %v508, 128
        %513 = vxpose.xlu0.c.b16.cont [2/8] 0, 128
        %514 = vxpose.xlu0.c.b16.cont [3/8] 0, 128
        %515 = vxpose.xlu0.c.b16.cont [4/8] 0, 128
        %516 = vxpose.xlu0.c.b16.cont [5/8] 0, 128
        %517 = vxpose.xlu0.c.b16.cont [6/8] 0, 128
        %518 = vxpose.xlu0.c.b16.cont [7/8] 0, 128
        %519 = vxpose.xlu0.c.b16.end [8/8] 0, 128
        %v520 = vpop.trf.xlu0
        %v521 = vpop.trf.xlu0
        %v522 = vpop.trf.xlu0
        %v523 = vpop.trf.xlu0
        %v524 = vpop.trf.xlu0
        %v525 = vpop.trf.xlu0
        %v526 = vpop.trf.xlu0
        %v527 = vpop.trf.xlu0
        %528 = vxpose.xlu0.c.b16.start [1/8] %v509, 128
        %529 = vxpose.xlu0.c.b16.cont [2/8] 0, 128
        %530 = vxpose.xlu0.c.b16.cont [3/8] 0, 128
        %531 = vxpose.xlu0.c.b16.cont [4/8] 0, 128
        %532 = vxpose.xlu0.c.b16.cont [5/8] 0, 128
        %533 = vxpose.xlu0.c.b16.cont [6/8] 0, 128
        %534 = vxpose.xlu0.c.b16.cont [7/8] 0, 128
        %535 = vxpose.xlu0.c.b16.end [8/8] 0, 128
        %v536 = vpop.trf.xlu0
        %v537 = vpop.trf.xlu0
        %v538 = vpop.trf.xlu0
        %v539 = vpop.trf.xlu0
        %v540 = vpop.trf.xlu0
        %v541 = vpop.trf.xlu0
        %v542 = vpop.trf.xlu0
        %v543 = vpop.trf.xlu0
        %v545 = vunpack.c.l.b16 %v504
        %v546 = vunpack.c.h.b16 %v504
        %v547 = vpack.c.b16 %v545, %v545
        %v548 = vpack.c.b16 %v546, %v546
        %vm549 = vcmask 64512
        %v551 = vsel %vm549, %v520, 0
        %v554 = vsel %vm549, %v521, 0
        %v557 = vsel %vm549, %v522, 0
        %v560 = vsel %vm549, %v523, 0
        %v563 = vsel %vm549, %v524, 0
        %v566 = vsel %vm549, %v525, 0
        %v569 = vsel %vm549, %v526, 0
        %v572 = vsel %vm549, %v527, 0
        %v575 = vsel %vm549, %v536, 0
        %v578 = vsel %vm549, %v537, 0
        %v581 = vsel %vm549, %v538, 0
        %v584 = vsel %vm549, %v539, 0
        %v587 = vsel %vm549, %v540, 0
        %v590 = vsel %vm549, %v541, 0
        %v593 = vsel %vm549, %v542, 0
        %v596 = vsel %vm549, %v543, 0
        %vm598 = vcmask 1043456
        %v600 = vsel %vm598, %v547, 0
        %v603 = vsel %vm598, %v548, 0
        %605 = vmatprep.subr.bf16.mxu0 0
        %606 = vmatpush1.bf16.msra.mxu0 0
        %607 = vmatprep.subr.bf16.mxu0 0
        %608 = vmatpush1.bf16.msra.mxu0 0
        %609 = vmatprep.subr.bf16.mxu0 0
        %610 = vmatpush1.bf16.msra.mxu0 0
        %611 = vmatprep.subr.bf16.mxu0 0
        %612 = vmatpush1.bf16.msra.mxu0 0
        %613 = vmatprep.subr.bf16.mxu0 0
        %614 = vmatpush1.bf16.msra.mxu0 0
        %615 = vmatprep.subr.bf16.mxu0 0
        %616 = vmatpush1.bf16.msra.mxu0 0
        %617 = vmatprep.subr.bf16.mxu0 0
        %618 = vmatpush1.bf16.msra.mxu0 0
        %619 = vmatprep.subr.bf16.mxu0 %v603
        %620 = vmatpush1.bf16.msra.mxu0 %v600
        %621 = vmatprep.subr.bf16.mxu0 0
        %622 = vmatpush2.bf16.msra.mxu0 0
        %623 = vmatprep.subr.bf16.mxu0 0
        %624 = vmatpush2.bf16.msra.mxu0 0
        %625 = vmatprep.subr.bf16.mxu0 0
        %626 = vmatpush2.bf16.msra.mxu0 0
        %627 = vmatprep.subr.bf16.mxu0 0
        %628 = vmatpush2.bf16.msra.mxu0 0
        %629 = vmatprep.subr.bf16.mxu0 0
        %630 = vmatpush2.bf16.msra.mxu0 0
        %631 = vmatprep.subr.bf16.mxu0 0
        %632 = vmatpush2.bf16.msra.mxu0 0
        %633 = vmatprep.subr.bf16.mxu0 0
        %634 = vmatpush2.bf16.msra.mxu0 0
        %635 = vmatprep.subr.bf16.mxu0 0
        %636 = vmatpush2.bf16.msra.mxu0 0
        %637 = vmatprep.mubr.bf16.mxu0 0
        %638 = vmatmul.mubr.bf16.gmra.mxu0 %v551
        %v639 = vpop.f32.mrf.mxu0
        %v640 = vadd.f32 0.0, %v639
        %v641 = vpop.f32.mrf.mxu0
        %v642 = vadd.f32 0.0, %v641
        %v643 = vpop.f32.mrf.mxu0
        %v644 = vadd.f32 0.0, %v643
        %v645 = vpop.f32.mrf.mxu0
        %v646 = vadd.f32 0.0, %v645
        %647 = vmatprep.mubr.bf16.mxu0 0
        %648 = vmatmul.mubr.bf16.gmra.mxu0 %v554
        %v649 = vpop.f32.mrf.mxu0
        %v650 = vadd.f32 0.0, %v649
        %v651 = vpop.f32.mrf.mxu0
        %v652 = vadd.f32 0.0, %v651
        %v653 = vpop.f32.mrf.mxu0
        %v654 = vadd.f32 0.0, %v653
        %v655 = vpop.f32.mrf.mxu0
        %v656 = vadd.f32 0.0, %v655
        %657 = vmatprep.mubr.bf16.mxu0 0
        %658 = vmatmul.mubr.bf16.gmra.mxu0 %v557
        %v659 = vpop.f32.mrf.mxu0
        %v660 = vadd.f32 0.0, %v659
        %v661 = vpop.f32.mrf.mxu0
        %v662 = vadd.f32 0.0, %v661
        %v663 = vpop.f32.mrf.mxu0
        %v664 = vadd.f32 0.0, %v663
        %v665 = vpop.f32.mrf.mxu0
        %v666 = vadd.f32 0.0, %v665
        %667 = vmatprep.mubr.bf16.mxu0 0
        %668 = vmatmul.mubr.bf16.gmra.mxu0 %v560
        %v669 = vpop.f32.mrf.mxu0
        %v670 = vadd.f32 0.0, %v669
        %v671 = vpop.f32.mrf.mxu0
        %v672 = vadd.f32 0.0, %v671
        %v673 = vpop.f32.mrf.mxu0
        %v674 = vadd.f32 0.0, %v673
        %v675 = vpop.f32.mrf.mxu0
        %v676 = vadd.f32 0.0, %v675
        %677 = vmatprep.mubr.bf16.mxu0 0
        %678 = vmatmul.mubr.bf16.gmra.mxu0 %v563
        %v679 = vpop.f32.mrf.mxu0
        %v680 = vadd.f32 0.0, %v679
        %v681 = vpop.f32.mrf.mxu0
        %v682 = vadd.f32 0.0, %v681
        %v683 = vpop.f32.mrf.mxu0
        %v684 = vadd.f32 0.0, %v683
        %v685 = vpop.f32.mrf.mxu0
        %v686 = vadd.f32 0.0, %v685
        %687 = vmatprep.mubr.bf16.mxu0 0
        %688 = vmatmul.mubr.bf16.gmra.mxu0 %v566
        %v689 = vpop.f32.mrf.mxu0
        %v690 = vadd.f32 0.0, %v689
        %v691 = vpop.f32.mrf.mxu0
        %v692 = vadd.f32 0.0, %v691
        %v693 = vpop.f32.mrf.mxu0
        %v694 = vadd.f32 0.0, %v693
        %v695 = vpop.f32.mrf.mxu0
        %v696 = vadd.f32 0.0, %v695
        %697 = vmatprep.mubr.bf16.mxu0 0
        %698 = vmatmul.mubr.bf16.gmra.mxu0 %v569
        %v699 = vpop.f32.mrf.mxu0
        %v700 = vadd.f32 0.0, %v699
        %v701 = vpop.f32.mrf.mxu0
        %v702 = vadd.f32 0.0, %v701
        %v703 = vpop.f32.mrf.mxu0
        %v704 = vadd.f32 0.0, %v703
        %v705 = vpop.f32.mrf.mxu0
        %v706 = vadd.f32 0.0, %v705
        %707 = vmatprep.mubr.bf16.mxu0 0
        %708 = vmatmul.mubr.bf16.gmra.mxu0 %v572
        %v709 = vpop.f32.mrf.mxu0
        %v710 = vadd.f32 0.0, %v709
        %v711 = vpop.f32.mrf.mxu0
        %v712 = vadd.f32 0.0, %v711
        %v713 = vpop.f32.mrf.mxu0
        %v714 = vadd.f32 0.0, %v713
        %v715 = vpop.f32.mrf.mxu0
        %v716 = vadd.f32 0.0, %v715
        %717 = vmatprep.mubr.bf16.mxu0 0
        %718 = vmatmul.mubr.bf16.gmra.mxu0 %v575
        %v719 = vpop.f32.mrf.mxu0
        %v720 = vadd.f32 0.0, %v719
        %v721 = vpop.f32.mrf.mxu0
        %v722 = vadd.f32 0.0, %v721
        %v723 = vpop.f32.mrf.mxu0
        %v724 = vadd.f32 0.0, %v723
        %v725 = vpop.f32.mrf.mxu0
        %v726 = vadd.f32 0.0, %v725
        %727 = vmatprep.mubr.bf16.mxu0 0
        %728 = vmatmul.mubr.bf16.gmra.mxu0 %v578
        %v729 = vpop.f32.mrf.mxu0
        %v730 = vadd.f32 0.0, %v729
        %v731 = vpop.f32.mrf.mxu0
        %v732 = vadd.f32 0.0, %v731
        %v733 = vpop.f32.mrf.mxu0
        %v734 = vadd.f32 0.0, %v733
        %v735 = vpop.f32.mrf.mxu0
        %v736 = vadd.f32 0.0, %v735
        %737 = vmatprep.mubr.bf16.mxu0 0
        %738 = vmatmul.mubr.bf16.gmra.mxu0 %v581
        %v739 = vpop.f32.mrf.mxu0
        %v740 = vadd.f32 0.0, %v739
        %v741 = vpop.f32.mrf.mxu0
        %v742 = vadd.f32 0.0, %v741
        %v743 = vpop.f32.mrf.mxu0
        %v744 = vadd.f32 0.0, %v743
        %v745 = vpop.f32.mrf.mxu0
        %v746 = vadd.f32 0.0, %v745
        %747 = vmatprep.mubr.bf16.mxu0 0
        %748 = vmatmul.mubr.bf16.gmra.mxu0 %v584
        %v749 = vpop.f32.mrf.mxu0
        %v750 = vadd.f32 0.0, %v749
        %v751 = vpop.f32.mrf.mxu0
        %v752 = vadd.f32 0.0, %v751
        %v753 = vpop.f32.mrf.mxu0
        %v754 = vadd.f32 0.0, %v753
        %v755 = vpop.f32.mrf.mxu0
        %v756 = vadd.f32 0.0, %v755
        %757 = vmatprep.mubr.bf16.mxu0 0
        %758 = vmatmul.mubr.bf16.gmra.mxu0 %v587
        %v759 = vpop.f32.mrf.mxu0
        %v760 = vadd.f32 0.0, %v759
        %v761 = vpop.f32.mrf.mxu0
        %v762 = vadd.f32 0.0, %v761
        %v763 = vpop.f32.mrf.mxu0
        %v764 = vadd.f32 0.0, %v763
        %v765 = vpop.f32.mrf.mxu0
        %v766 = vadd.f32 0.0, %v765
        %767 = vmatprep.mubr.bf16.mxu0 0
        %768 = vmatmul.mubr.bf16.gmra.mxu0 %v590
        %v769 = vpop.f32.mrf.mxu0
        %v770 = vadd.f32 0.0, %v769
        %v771 = vpop.f32.mrf.mxu0
        %v772 = vadd.f32 0.0, %v771
        %v773 = vpop.f32.mrf.mxu0
        %v774 = vadd.f32 0.0, %v773
        %v775 = vpop.f32.mrf.mxu0
        %v776 = vadd.f32 0.0, %v775
        %777 = vmatprep.mubr.bf16.mxu0 0
        %778 = vmatmul.mubr.bf16.gmra.mxu0 %v593
        %v779 = vpop.f32.mrf.mxu0
        %v780 = vadd.f32 0.0, %v779
        %v781 = vpop.f32.mrf.mxu0
        %v782 = vadd.f32 0.0, %v781
        %v783 = vpop.f32.mrf.mxu0
        %v784 = vadd.f32 0.0, %v783
        %v785 = vpop.f32.mrf.mxu0
        %v786 = vadd.f32 0.0, %v785
        %787 = vmatprep.mubr.bf16.mxu0 0
        %788 = vmatmul.mubr.bf16.gmra.mxu0 %v596
        %v789 = vpop.f32.mrf.mxu0
        %v790 = vadd.f32 0.0, %v789
        %v791 = vpop.f32.mrf.mxu0
        %v792 = vadd.f32 0.0, %v791
        %v793 = vpop.f32.mrf.mxu0
        %v794 = vadd.f32 0.0, %v793
        %v795 = vpop.f32.mrf.mxu0
        %v796 = vadd.f32 0.0, %v795
        %797 = vdwg.mxu0
        %v798 = vld [vmem:[#allocation3] sm:$0x3]
        %v799 = vmax.f32 %v640, %v650
        %v800 = vmax.f32 %v644, %v654
        %v801 = vmax.f32 %v799, %v660
        %v802 = vmax.f32 %v800, %v664
        %v803 = vmax.f32 %v801, %v670
        %v804 = vmax.f32 %v802, %v674
        %v805 = vmax.f32 %v803, %v680
        %v806 = vmax.f32 %v804, %v684
        %v807 = vmax.f32 %v805, %v690
        %v808 = vmax.f32 %v806, %v694
        %v809 = vmax.f32 %v807, %v700
        %v810 = vmax.f32 %v808, %v704
        %v811 = vmax.f32 %v809, %v710
        %v812 = vmax.f32 %v810, %v714
        %v813 = vmax.f32 %v811, %v720
        %v814 = vmax.f32 %v812, %v724
        %v815 = vmax.f32 %v813, %v730
        %v816 = vmax.f32 %v814, %v734
        %v817 = vmax.f32 %v815, %v740
        %v818 = vmax.f32 %v816, %v744
        %v819 = vmax.f32 %v817, %v750
        %v820 = vmax.f32 %v818, %v754
        %v821 = vmax.f32 %v819, %v760
        %v822 = vmax.f32 %v820, %v764
        %v823 = vmax.f32 %v821, %v770
        %v824 = vmax.f32 %v822, %v774
        %v825 = vmax.f32 %v823, %v780
        %v826 = vmax.f32 %v824, %v784
        %v827 = vmax.f32 %v825, %v790
        %v828 = vmax.f32 %v826, %v794
        %v829 = vmax.f32 %v827, %v828
        %v830 = vrot.slane %v829, 4
        %v831 = vmax.f32 %v829, %v830
        %v832 = vrot.slane %v831, 2
        %v833 = vmax.f32 %v831, %v832
        %v834 = vrot.slane %v833, 1
        %v835 = vmax.f32 %v833, %v834
        %v836 = vmax.f32 %v642, %v652
        %v837 = vmax.f32 %v646, %v656
        %v838 = vmax.f32 %v836, %v662
        %v839 = vmax.f32 %v837, %v666
        %v840 = vmax.f32 %v838, %v672
        %v841 = vmax.f32 %v839, %v676
        %v842 = vmax.f32 %v840, %v682
        %v843 = vmax.f32 %v841, %v686
        %v844 = vmax.f32 %v842, %v692
        %v845 = vmax.f32 %v843, %v696
        %v846 = vmax.f32 %v844, %v702
        %v847 = vmax.f32 %v845, %v706
        %v848 = vmax.f32 %v846, %v712
        %v849 = vmax.f32 %v847, %v716
        %v850 = vmax.f32 %v848, %v722
        %v851 = vmax.f32 %v849, %v726
        %v852 = vmax.f32 %v850, %v732
        %v853 = vmax.f32 %v851, %v736
        %v854 = vmax.f32 %v852, %v742
        %v855 = vmax.f32 %v853, %v746
        %v856 = vmax.f32 %v854, %v752
        %v857 = vmax.f32 %v855, %v756
        %v858 = vmax.f32 %v856, %v762
        %v859 = vmax.f32 %v857, %v766
        %v860 = vmax.f32 %v858, %v772
        %v861 = vmax.f32 %v859, %v776
        %v862 = vmax.f32 %v860, %v782
        %v863 = vmax.f32 %v861, %v786
        %v864 = vmax.f32 %v862, %v792
        %v865 = vmax.f32 %v863, %v796
        %v866 = vmax.f32 %v864, %v865
        %v867 = vrot.slane %v866, 4
        %v868 = vmax.f32 %v866, %v867
        %v869 = vrot.slane %v868, 2
        %v870 = vmax.f32 %v868, %v869
        %v871 = vrot.slane %v870, 1
        %v872 = vmax.f32 %v870, %v871
        %v875 = vcombine.low %v835, %v872
        %v877 = vunpack.c.l.s4 1966171168
        %v878 = vunpack.c.0.s8 %v877
        %v879 = vlaneseq
        %v880 = vshrl.u32 %v879, 7
        %v881 = vsub.s32 %v878, %v880
        %v882 = vrot.slane %v875, %v881
        %v884 = vunpack.c.l.s4 1966171168
        %v885 = vunpack.c.0.s8 %v884
        %v886 = vlaneseq
        %v887 = vshrl.u32 %v886, 7
        %v888 = vsub.s32 %v885, %v887
        %v889 = vrot.slane %v882, %v888
        %v891 = vmax.f32 %v798, %v889
        %v892 = vsub.f32 %v798, %v891
        %v893 = vmul.f32 %v892, 1.442695
        %v894 = vpow.pop %v893
        %v896 = vlaneseq
        %v897 = vshrl.u32 %v896, 7
        %v898 = vsub.s32 0, %v897
        %v899 = vrot.slane %v891, %v898
        %v900 = vlaneseq
        %v901 = vshrl.u32 %v900, 7
        %v902 = vsub.s32 1, %v901
        %v903 = vrot.slane %v891, %v902
        %v906 = vsub.f32 %v640, %v899
        %v907 = vsub.f32 %v642, %v903
        %v908 = vsub.f32 %v644, %v899
        %v909 = vsub.f32 %v646, %v903
        %v910 = vsub.f32 %v650, %v899
        %v911 = vsub.f32 %v652, %v903
        %v912 = vsub.f32 %v654, %v899
        %v913 = vsub.f32 %v656, %v903
        %v914 = vsub.f32 %v660, %v899
        %v915 = vsub.f32 %v662, %v903
        %v916 = vsub.f32 %v664, %v899
        %v917 = vsub.f32 %v666, %v903
        %v918 = vsub.f32 %v670, %v899
        %v919 = vsub.f32 %v672, %v903
        %v920 = vsub.f32 %v674, %v899
        %v921 = vsub.f32 %v676, %v903
        %v922 = vsub.f32 %v680, %v899
        %v923 = vsub.f32 %v682, %v903
        %v924 = vsub.f32 %v684, %v899
        %v925 = vsub.f32 %v686, %v903
        %v926 = vsub.f32 %v690, %v899
        %v927 = vsub.f32 %v692, %v903
        %v928 = vsub.f32 %v694, %v899
        %v929 = vsub.f32 %v696, %v903
        %v930 = vsub.f32 %v700, %v899
        %v931 = vsub.f32 %v702, %v903
        %v932 = vsub.f32 %v704, %v899
        %v933 = vsub.f32 %v706, %v903
        %v934 = vsub.f32 %v710, %v899
        %v935 = vsub.f32 %v712, %v903
        %v936 = vsub.f32 %v714, %v899
        %v937 = vsub.f32 %v716, %v903
        %v938 = vsub.f32 %v720, %v899
        %v939 = vsub.f32 %v722, %v903
        %v940 = vsub.f32 %v724, %v899
        %v941 = vsub.f32 %v726, %v903
        %v942 = vsub.f32 %v730, %v899
        %v943 = vsub.f32 %v732, %v903
        %v944 = vsub.f32 %v734, %v899
        %v945 = vsub.f32 %v736, %v903
        %v946 = vsub.f32 %v740, %v899
        %v947 = vsub.f32 %v742, %v903
        %v948 = vsub.f32 %v744, %v899
        %v949 = vsub.f32 %v746, %v903
        %v950 = vsub.f32 %v750, %v899
        %v951 = vsub.f32 %v752, %v903
        %v952 = vsub.f32 %v754, %v899
        %v953 = vsub.f32 %v756, %v903
        %v954 = vsub.f32 %v760, %v899
        %v955 = vsub.f32 %v762, %v903
        %v956 = vsub.f32 %v764, %v899
        %v957 = vsub.f32 %v766, %v903
        %v958 = vsub.f32 %v770, %v899
        %v959 = vsub.f32 %v772, %v903
        %v960 = vsub.f32 %v774, %v899
        %v961 = vsub.f32 %v776, %v903
        %v962 = vsub.f32 %v780, %v899
        %v963 = vsub.f32 %v782, %v903
        %v964 = vsub.f32 %v784, %v899
        %v965 = vsub.f32 %v786, %v903
        %v966 = vsub.f32 %v790, %v899
        %v967 = vsub.f32 %v792, %v903
        %v968 = vsub.f32 %v794, %v899
        %v969 = vsub.f32 %v796, %v903
        %v970 = vmul.f32 %v906, 1.442695
        %v971 = vpow.pop %v970
        %v972 = vmul.f32 %v907, 1.442695
        %v973 = vpow.pop %v972
        %v974 = vmul.f32 %v908, 1.442695
        %v975 = vpow.pop %v974
        %v976 = vmul.f32 %v909, 1.442695
        %v977 = vpow.pop %v976
        %v978 = vmul.f32 %v910, 1.442695
        %v979 = vpow.pop %v978
        %v980 = vmul.f32 %v911, 1.442695
        %v981 = vpow.pop %v980
        %v982 = vmul.f32 %v912, 1.442695
        %v983 = vpow.pop %v982
        %v984 = vmul.f32 %v913, 1.442695
        %v985 = vpow.pop %v984
        %v986 = vmul.f32 %v914, 1.442695
        %v987 = vpow.pop %v986
        %v988 = vmul.f32 %v915, 1.442695
        %v989 = vpow.pop %v988
        %v990 = vmul.f32 %v916, 1.442695
        %v991 = vpow.pop %v990
        %v992 = vmul.f32 %v917, 1.442695
        %v993 = vpow.pop %v992
        %v994 = vmul.f32 %v918, 1.442695
        %v995 = vpow.pop %v994
        %v996 = vmul.f32 %v919, 1.442695
        %v997 = vpow.pop %v996
        %v998 = vmul.f32 %v920, 1.442695
        %v999 = vpow.pop %v998
        %v1000 = vmul.f32 %v921, 1.442695
        %v1001 = vpow.pop %v1000
        %v1002 = vmul.f32 %v922, 1.442695
        %v1003 = vpow.pop %v1002
        %v1004 = vmul.f32 %v923, 1.442695
        %v1005 = vpow.pop %v1004
        %v1006 = vmul.f32 %v924, 1.442695
        %v1007 = vpow.pop %v1006
        %v1008 = vmul.f32 %v925, 1.442695
        %v1009 = vpow.pop %v1008
        %v1010 = vmul.f32 %v926, 1.442695
        %v1011 = vpow.pop %v1010
        %v1012 = vmul.f32 %v927, 1.442695
        %v1013 = vpow.pop %v1012
        %v1014 = vmul.f32 %v928, 1.442695
        %v1015 = vpow.pop %v1014
        %v1016 = vmul.f32 %v929, 1.442695
        %v1017 = vpow.pop %v1016
        %v1018 = vmul.f32 %v930, 1.442695
        %v1019 = vpow.pop %v1018
        %v1020 = vmul.f32 %v931, 1.442695
        %v1021 = vpow.pop %v1020
        %v1022 = vmul.f32 %v932, 1.442695
        %v1023 = vpow.pop %v1022
        %v1024 = vmul.f32 %v933, 1.442695
        %v1025 = vpow.pop %v1024
        %v1026 = vmul.f32 %v934, 1.442695
        %v1027 = vpow.pop %v1026
        %v1028 = vmul.f32 %v935, 1.442695
        %v1029 = vpow.pop %v1028
        %v1030 = vmul.f32 %v936, 1.442695
        %v1031 = vpow.pop %v1030
        %v1032 = vmul.f32 %v937, 1.442695
        %v1033 = vpow.pop %v1032
        %v1034 = vmul.f32 %v938, 1.442695
        %v1035 = vpow.pop %v1034
        %v1036 = vmul.f32 %v939, 1.442695
        %v1037 = vpow.pop %v1036
        %v1038 = vmul.f32 %v940, 1.442695
        %v1039 = vpow.pop %v1038
        %v1040 = vmul.f32 %v941, 1.442695
        %v1041 = vpow.pop %v1040
        %v1042 = vmul.f32 %v942, 1.442695
        %v1043 = vpow.pop %v1042
        %v1044 = vmul.f32 %v943, 1.442695
        %v1045 = vpow.pop %v1044
        %v1046 = vmul.f32 %v944, 1.442695
        %v1047 = vpow.pop %v1046
        %v1048 = vmul.f32 %v945, 1.442695
        %v1049 = vpow.pop %v1048
        %v1050 = vmul.f32 %v946, 1.442695
        %v1051 = vpow.pop %v1050
        %v1052 = vmul.f32 %v947, 1.442695
        %v1053 = vpow.pop %v1052
        %v1054 = vmul.f32 %v948, 1.442695
        %v1055 = vpow.pop %v1054
        %v1056 = vmul.f32 %v949, 1.442695
        %v1057 = vpow.pop %v1056
        %v1058 = vmul.f32 %v950, 1.442695
        %v1059 = vpow.pop %v1058
        %v1060 = vmul.f32 %v951, 1.442695
        %v1061 = vpow.pop %v1060
        %v1062 = vmul.f32 %v952, 1.442695
        %v1063 = vpow.pop %v1062
        %v1064 = vmul.f32 %v953, 1.442695
        %v1065 = vpow.pop %v1064
        %v1066 = vmul.f32 %v954, 1.442695
        %v1067 = vpow.pop %v1066
        %v1068 = vmul.f32 %v955, 1.442695
        %v1069 = vpow.pop %v1068
        %v1070 = vmul.f32 %v956, 1.442695
        %v1071 = vpow.pop %v1070
        %v1072 = vmul.f32 %v957, 1.442695
        %v1073 = vpow.pop %v1072
        %v1074 = vmul.f32 %v958, 1.442695
        %v1075 = vpow.pop %v1074
        %v1076 = vmul.f32 %v959, 1.442695
        %v1077 = vpow.pop %v1076
        %v1078 = vmul.f32 %v960, 1.442695
        %v1079 = vpow.pop %v1078
        %v1080 = vmul.f32 %v961, 1.442695
        %v1081 = vpow.pop %v1080
        %v1082 = vmul.f32 %v962, 1.442695
        %v1083 = vpow.pop %v1082
        %v1084 = vmul.f32 %v963, 1.442695
        %v1085 = vpow.pop %v1084
        %v1086 = vmul.f32 %v964, 1.442695
        %v1087 = vpow.pop %v1086
        %v1088 = vmul.f32 %v965, 1.442695
        %v1089 = vpow.pop %v1088
        %v1090 = vmul.f32 %v966, 1.442695
        %v1091 = vpow.pop %v1090
        %v1092 = vmul.f32 %v967, 1.442695
        %v1093 = vpow.pop %v1092
        %v1094 = vmul.f32 %v968, 1.442695
        %v1095 = vpow.pop %v1094
        %v1096 = vmul.f32 %v969, 1.442695
        %v1097 = vpow.pop %v1096
        %v1098 = vld [vmem:[#allocation4] sm:$0x3]
        %v1099 = vmul.f32 %v894, %v1098
        %v1100 = vadd.f32 %v971, %v975
        %v1101 = vadd.f32 %v1100, %v979
        %v1102 = vadd.f32 %v1101, %v983
        %v1103 = vadd.f32 %v1102, %v987
        %v1104 = vadd.f32 %v1103, %v991
        %v1105 = vadd.f32 %v1104, %v995
        %v1106 = vadd.f32 %v1105, %v999
        %v1107 = vadd.f32 %v1106, %v1003
        %v1108 = vadd.f32 %v1107, %v1007
        %v1109 = vadd.f32 %v1108, %v1011
        %v1110 = vadd.f32 %v1109, %v1015
        %v1111 = vadd.f32 %v1110, %v1019
        %v1112 = vadd.f32 %v1111, %v1023
        %v1113 = vadd.f32 %v1112, %v1027
        %v1114 = vadd.f32 %v1113, %v1031
        %v1115 = vadd.f32 %v1114, %v1035
        %v1116 = vadd.f32 %v1115, %v1039
        %v1117 = vadd.f32 %v1116, %v1043
        %v1118 = vadd.f32 %v1117, %v1047
        %v1119 = vadd.f32 %v1118, %v1051
        %v1120 = vadd.f32 %v1119, %v1055
        %v1121 = vadd.f32 %v1120, %v1059
        %v1122 = vadd.f32 %v1121, %v1063
        %v1123 = vadd.f32 %v1122, %v1067
        %v1124 = vadd.f32 %v1123, %v1071
        %v1125 = vadd.f32 %v1124, %v1075
        %v1126 = vadd.f32 %v1125, %v1079
        %v1127 = vadd.f32 %v1126, %v1083
        %v1128 = vadd.f32 %v1127, %v1087
        %v1129 = vadd.f32 %v1128, %v1091
        %v1130 = vadd.f32 %v1129, %v1095
        %v1131 = vrot.slane %v1130, 4
        %v1132 = vadd.f32 %v1130, %v1131
        %v1133 = vrot.slane %v1132, 2
        %v1134 = vadd.f32 %v1132, %v1133
        %v1135 = vrot.slane %v1134, 1
        %v1136 = vadd.f32 %v1134, %v1135
        %v1137 = vadd.f32 %v973, %v977
        %v1138 = vadd.f32 %v1137, %v981
        %v1139 = vadd.f32 %v1138, %v985
        %v1140 = vadd.f32 %v1139, %v989
        %v1141 = vadd.f32 %v1140, %v993
        %v1142 = vadd.f32 %v1141, %v997
        %v1143 = vadd.f32 %v1142, %v1001
        %v1144 = vadd.f32 %v1143, %v1005
        %v1145 = vadd.f32 %v1144, %v1009
        %v1146 = vadd.f32 %v1145, %v1013
        %v1147 = vadd.f32 %v1146, %v1017
        %v1148 = vadd.f32 %v1147, %v1021
        %v1149 = vadd.f32 %v1148, %v1025
        %v1150 = vadd.f32 %v1149, %v1029
        %v1151 = vadd.f32 %v1150, %v1033
        %v1152 = vadd.f32 %v1151, %v1037
        %v1153 = vadd.f32 %v1152, %v1041
        %v1154 = vadd.f32 %v1153, %v1045
        %v1155 = vadd.f32 %v1154, %v1049
        %v1156 = vadd.f32 %v1155, %v1053
        %v1157 = vadd.f32 %v1156, %v1057
        %v1158 = vadd.f32 %v1157, %v1061
        %v1159 = vadd.f32 %v1158, %v1065
        %v1160 = vadd.f32 %v1159, %v1069
        %v1161 = vadd.f32 %v1160, %v1073
        %v1162 = vadd.f32 %v1161, %v1077
        %v1163 = vadd.f32 %v1162, %v1081
        %v1164 = vadd.f32 %v1163, %v1085
        %v1165 = vadd.f32 %v1164, %v1089
        %v1166 = vadd.f32 %v1165, %v1093
        %v1167 = vadd.f32 %v1166, %v1097
        %v1168 = vrot.slane %v1167, 4
        %v1169 = vadd.f32 %v1167, %v1168
        %v1170 = vrot.slane %v1169, 2
        %v1171 = vadd.f32 %v1169, %v1170
        %v1172 = vrot.slane %v1171, 1
        %v1173 = vadd.f32 %v1171, %v1172
        %v1176 = vcombine.low %v1136, %v1173
        %v1178 = vunpack.c.l.s4 1966171168
        %v1179 = vunpack.c.0.s8 %v1178
        %v1180 = vlaneseq
        %v1181 = vshrl.u32 %v1180, 7
        %v1182 = vsub.s32 %v1179, %v1181
        %v1183 = vrot.slane %v1176, %v1182
        %v1185 = vunpack.c.l.s4 1966171168
        %v1186 = vunpack.c.0.s8 %v1185
        %v1187 = vlaneseq
        %v1188 = vshrl.u32 %v1187, 7
        %v1189 = vsub.s32 %v1186, %v1188
        %v1190 = vrot.slane %v1183, %v1189
        %v1192 = vadd.f32 %v1099, %v1190
        %v1193 = vlaneseq
        %vm1194 = vcmp.ge.s32.totalorder %v1193, 0
        %vm1195 = vcmp.lt.s32.totalorder %v1193, 256
        %vm1196 = vmand %vm1194, %vm1195
        %1197 = vst.msk [vmem:[#allocation4] sm:$0x3] %vm1196, %v1192
        %v1198 = vpack.c.bf16 %v975, %v971
        %v1199 = vpack.c.bf16 %v977, %v973
        %v1200 = vpack.c.bf16 %v983, %v979
        %v1201 = vpack.c.bf16 %v985, %v981
        %v1202 = vpack.c.bf16 %v991, %v987
        %v1203 = vpack.c.bf16 %v993, %v989
        %v1204 = vpack.c.bf16 %v999, %v995
        %v1205 = vpack.c.bf16 %v1001, %v997
        %v1206 = vpack.c.bf16 %v1007, %v1003
        %v1207 = vpack.c.bf16 %v1009, %v1005
        %v1208 = vpack.c.bf16 %v1015, %v1011
        %v1209 = vpack.c.bf16 %v1017, %v1013
        %v1210 = vpack.c.bf16 %v1023, %v1019
        %v1211 = vpack.c.bf16 %v1025, %v1021
        %v1212 = vpack.c.bf16 %v1031, %v1027
        %v1213 = vpack.c.bf16 %v1033, %v1029
        %v1214 = vpack.c.bf16 %v1039, %v1035
        %v1215 = vpack.c.bf16 %v1041, %v1037
        %v1216 = vpack.c.bf16 %v1047, %v1043
        %v1217 = vpack.c.bf16 %v1049, %v1045
        %v1218 = vpack.c.bf16 %v1055, %v1051
        %v1219 = vpack.c.bf16 %v1057, %v1053
        %v1220 = vpack.c.bf16 %v1063, %v1059
        %v1221 = vpack.c.bf16 %v1065, %v1061
        %v1222 = vpack.c.bf16 %v1071, %v1067
        %v1223 = vpack.c.bf16 %v1073, %v1069
        %v1224 = vpack.c.bf16 %v1079, %v1075
        %v1225 = vpack.c.bf16 %v1081, %v1077
        %v1226 = vpack.c.bf16 %v1087, %v1083
        %v1227 = vpack.c.bf16 %v1089, %v1085
        %v1228 = vpack.c.bf16 %v1095, %v1091
        %v1229 = vpack.c.bf16 %v1097, %v1093
        %v1238 = vunpack.c.l.b16 %v496
        %v1239 = vunpack.c.h.b16 %v496
        %v1240 = vunpack.c.l.b16 %v497
        %v1241 = vunpack.c.h.b16 %v497
        %v1242 = vunpack.c.l.b16 %v498
        %v1243 = vunpack.c.h.b16 %v498
        %v1244 = vunpack.c.l.b16 %v499
        %v1245 = vunpack.c.h.b16 %v499
        %v1246 = vunpack.c.l.b16 %v500
        %v1247 = vunpack.c.h.b16 %v500
        %v1248 = vunpack.c.l.b16 %v501
        %v1249 = vunpack.c.h.b16 %v501
        %v1250 = vunpack.c.l.b16 %v502
        %v1251 = vunpack.c.h.b16 %v502
        %v1252 = vunpack.c.l.b16 %v503
        %v1253 = vunpack.c.h.b16 %v503
        %v1254 = vpack.c.b16 %v1240, %v1238
        %v1255 = vpack.c.b16 %v1241, %v1239
        %v1256 = vpack.c.b16 %v1244, %v1242
        %v1257 = vpack.c.b16 %v1245, %v1243
        %v1258 = vpack.c.b16 %v1248, %v1246
        %v1259 = vpack.c.b16 %v1249, %v1247
        %v1260 = vpack.c.b16 %v1252, %v1250
        %v1261 = vpack.c.b16 %v1253, %v1251
        %1270 = vmatprep.subr.bf16.mxu0 %v1213
        %1271 = vmatpush1.bf16.msra.mxu0 %v1212
        %1272 = vmatprep.subr.bf16.mxu0 %v1211
        %1273 = vmatpush1.bf16.msra.mxu0 %v1210
        %1274 = vmatprep.subr.bf16.mxu0 %v1209
        %1275 = vmatpush1.bf16.msra.mxu0 %v1208
        %1276 = vmatprep.subr.bf16.mxu0 %v1207
        %1277 = vmatpush1.bf16.msra.mxu0 %v1206
        %1278 = vmatprep.subr.bf16.mxu0 %v1205
        %1279 = vmatpush1.bf16.msra.mxu0 %v1204
        %1280 = vmatprep.subr.bf16.mxu0 %v1203
        %1281 = vmatpush1.bf16.msra.mxu0 %v1202
        %1282 = vmatprep.subr.bf16.mxu0 %v1201
        %1283 = vmatpush1.bf16.msra.mxu0 %v1200
        %1284 = vmatprep.subr.bf16.mxu0 %v1199
        %1285 = vmatpush1.bf16.msra.mxu0 %v1198
        %1286 = vmatprep.subr.bf16.mxu0 %v1229
        %1287 = vmatpush2.bf16.msra.mxu0 %v1228
        %1288 = vmatprep.subr.bf16.mxu0 %v1227
        %1289 = vmatpush2.bf16.msra.mxu0 %v1226
        %1290 = vmatprep.subr.bf16.mxu0 %v1225
        %1291 = vmatpush2.bf16.msra.mxu0 %v1224
        %1292 = vmatprep.subr.bf16.mxu0 %v1223
        %1293 = vmatpush2.bf16.msra.mxu0 %v1222
        %1294 = vmatprep.subr.bf16.mxu0 %v1221
        %1295 = vmatpush2.bf16.msra.mxu0 %v1220
        %1296 = vmatprep.subr.bf16.mxu0 %v1219
        %1297 = vmatpush2.bf16.msra.mxu0 %v1218
        %1298 = vmatprep.subr.bf16.mxu0 %v1217
        %1299 = vmatpush2.bf16.msra.mxu0 %v1216
        %1300 = vmatprep.subr.bf16.mxu0 %v1215
        %1301 = vmatpush2.bf16.msra.mxu0 %v1214
        %1302 = vmatprep.mubr.bf16.mxu0 %v1255
        %1303 = vmatmul.mubr.bf16.gmra.mxu0 %v1254
        %v1304 = vpop.f32.mrf.mxu0
        %v1305 = vadd.f32 0.0, %v1304
        %v1306 = vpop.f32.mrf.mxu0
        %v1307 = vadd.f32 0.0, %v1306
        %v1308 = vpop.f32.mrf.mxu0
        %v1309 = vadd.f32 0.0, %v1308
        %v1310 = vpop.f32.mrf.mxu0
        %v1311 = vadd.f32 0.0, %v1310
        %1312 = vmatprep.mubr.bf16.mxu0 %v1257
        %1313 = vmatmul.mubr.bf16.gmra.mxu0 %v1256
        %v1314 = vpop.f32.mrf.mxu0
        %v1315 = vadd.f32 0.0, %v1314
        %v1316 = vpop.f32.mrf.mxu0
        %v1317 = vadd.f32 0.0, %v1316
        %v1318 = vpop.f32.mrf.mxu0
        %v1319 = vadd.f32 0.0, %v1318
        %v1320 = vpop.f32.mrf.mxu0
        %v1321 = vadd.f32 0.0, %v1320
        %1322 = vmatprep.mubr.bf16.mxu0 %v1259
        %1323 = vmatmul.mubr.bf16.gmra.mxu0 %v1258
        %v1324 = vpop.f32.mrf.mxu0
        %v1325 = vadd.f32 0.0, %v1324
        %v1326 = vpop.f32.mrf.mxu0
        %v1327 = vadd.f32 0.0, %v1326
        %v1328 = vpop.f32.mrf.mxu0
        %v1329 = vadd.f32 0.0, %v1328
        %v1330 = vpop.f32.mrf.mxu0
        %v1331 = vadd.f32 0.0, %v1330
        %1332 = vmatprep.mubr.bf16.mxu0 %v1261
        %1333 = vmatmul.mubr.bf16.gmra.mxu0 %v1260
        %v1334 = vpop.f32.mrf.mxu0
        %v1335 = vadd.f32 0.0, %v1334
        %v1336 = vpop.f32.mrf.mxu0
        %v1337 = vadd.f32 0.0, %v1336
        %v1338 = vpop.f32.mrf.mxu0
        %v1339 = vadd.f32 0.0, %v1338
        %v1340 = vpop.f32.mrf.mxu0
        %v1341 = vadd.f32 0.0, %v1340
        %1342 = vdwg.mxu0
        %v1343 = vld [vmem:[#allocation5] sm:$0xff]
        %v1344 = vld [vmem:[#allocation5 + $0x8] sm:$0xff]
        %v1345 = vld [vmem:[#allocation5 + $0x10] sm:$0xff]
        %v1346 = vld [vmem:[#allocation5 + $0x18] sm:$0xff]
        %v1347 = vld [vmem:[#allocation5 + $0x20] sm:$0xff]
        %v1348 = vld [vmem:[#allocation5 + $0x28] sm:$0xff]
        %v1349 = vld [vmem:[#allocation5 + $0x30] sm:$0xff]
        %v1350 = vld [vmem:[#allocation5 + $0x38] sm:$0xff]
        %v1351 = vld [vmem:[#allocation5 + $0x40] sm:$0xff]
        %v1352 = vld [vmem:[#allocation5 + $0x48] sm:$0xff]
        %v1353 = vld [vmem:[#allocation5 + $0x50] sm:$0xff]
        %v1354 = vld [vmem:[#allocation5 + $0x58] sm:$0xff]
        %v1355 = vld [vmem:[#allocation5 + $0x60] sm:$0xff]
        %v1356 = vld [vmem:[#allocation5 + $0x68] sm:$0xff]
        %v1357 = vld [vmem:[#allocation5 + $0x70] sm:$0xff]
        %v1358 = vld [vmem:[#allocation5 + $0x78] sm:$0xff]
        %v1360 = vlaneseq
        %v1361 = vshrl.u32 %v1360, 7
        %v1362 = vsub.s32 0, %v1361
        %v1363 = vrot.slane %v894, %v1362
        %v1364 = vlaneseq
        %v1365 = vshrl.u32 %v1364, 7
        %v1366 = vsub.s32 1, %v1365
        %v1367 = vrot.slane %v894, %v1366
        %v1370 = vmul.f32 %v1363, %v1343
        %v1371 = vmul.f32 %v1367, %v1344
        %v1372 = vmul.f32 %v1363, %v1345
        %v1373 = vmul.f32 %v1367, %v1346
        %v1374 = vmul.f32 %v1363, %v1347
        %v1375 = vmul.f32 %v1367, %v1348
        %v1376 = vmul.f32 %v1363, %v1349
        %v1377 = vmul.f32 %v1367, %v1350
        %v1378 = vmul.f32 %v1363, %v1351
        %v1379 = vmul.f32 %v1367, %v1352
        %v1380 = vmul.f32 %v1363, %v1353
        %v1381 = vmul.f32 %v1367, %v1354
        %v1382 = vmul.f32 %v1363, %v1355
        %v1383 = vmul.f32 %v1367, %v1356
        %v1384 = vmul.f32 %v1363, %v1357
        %v1385 = vmul.f32 %v1367, %v1358
        %v1386 = vadd.f32 %v1370, %v1305
        %v1387 = vadd.f32 %v1371, %v1307
        %v1388 = vadd.f32 %v1372, %v1309
        %v1389 = vadd.f32 %v1373, %v1311
        %v1390 = vadd.f32 %v1374, %v1315
        %v1391 = vadd.f32 %v1375, %v1317
        %v1392 = vadd.f32 %v1376, %v1319
        %v1393 = vadd.f32 %v1377, %v1321
        %v1394 = vadd.f32 %v1378, %v1325
        %v1395 = vadd.f32 %v1379, %v1327
        %v1396 = vadd.f32 %v1380, %v1329
        %v1397 = vadd.f32 %v1381, %v1331
        %v1398 = vadd.f32 %v1382, %v1335
        %v1399 = vadd.f32 %v1383, %v1337
        %v1400 = vadd.f32 %v1384, %v1339
        %v1401 = vadd.f32 %v1385, %v1341
        %1402 = vst [vmem:[#allocation5] sm:$0xff] %v1386
        %1403 = vst [vmem:[#allocation5 + $0x8] sm:$0xff] %v1387
        %1404 = vst [vmem:[#allocation5 + $0x10] sm:$0xff] %v1388
        %1405 = vst [vmem:[#allocation5 + $0x18] sm:$0xff] %v1389
        %1406 = vst [vmem:[#allocation5 + $0x20] sm:$0xff] %v1390
        %1407 = vst [vmem:[#allocation5 + $0x28] sm:$0xff] %v1391
        %1408 = vst [vmem:[#allocation5 + $0x30] sm:$0xff] %v1392
        %1409 = vst [vmem:[#allocation5 + $0x38] sm:$0xff] %v1393
        %1410 = vst [vmem:[#allocation5 + $0x40] sm:$0xff] %v1394
        %1411 = vst [vmem:[#allocation5 + $0x48] sm:$0xff] %v1395
        %1412 = vst [vmem:[#allocation5 + $0x50] sm:$0xff] %v1396
        %1413 = vst [vmem:[#allocation5 + $0x58] sm:$0xff] %v1397
        %1414 = vst [vmem:[#allocation5 + $0x60] sm:$0xff] %v1398
        %1415 = vst [vmem:[#allocation5 + $0x68] sm:$0xff] %v1399
        %1416 = vst [vmem:[#allocation5 + $0x70] sm:$0xff] %v1400
        %1417 = vst [vmem:[#allocation5 + $0x78] sm:$0xff] %v1401
        %1418 = vst.msk [vmem:[#allocation3] sm:$0x3] %vm1196, %v891
        // Predicated region
        $region61: #{tpu_custom_call.1} parent=43 // pred_check
          %p1419 = pneg %p400
        $region62: #{tpu_custom_call.1} parent=43 // pred_check_branch
          %1421 = sbr.rel (%p1419) target = $region64
        $region63: #{tpu_custom_call.1} parent=43 // pred_region
          %v1422 = vld [vmem:[#allocation4] sm:$0x3]
          %v1423 = vrcp.pop %v1422
          %v1424 = vld [vmem:[#allocation5] sm:$0xff]
          %v1425 = vld [vmem:[#allocation5 + $0x8] sm:$0xff]
          %v1426 = vld [vmem:[#allocation5 + $0x10] sm:$0xff]
          %v1427 = vld [vmem:[#allocation5 + $0x18] sm:$0xff]
          %v1428 = vld [vmem:[#allocation5 + $0x20] sm:$0xff]
          %v1429 = vld [vmem:[#allocation5 + $0x28] sm:$0xff]
          %v1430 = vld [vmem:[#allocation5 + $0x30] sm:$0xff]
          %v1431 = vld [vmem:[#allocation5 + $0x38] sm:$0xff]
          %v1432 = vld [vmem:[#allocation5 + $0x40] sm:$0xff]
          %v1433 = vld [vmem:[#allocation5 + $0x48] sm:$0xff]
          %v1434 = vld [vmem:[#allocation5 + $0x50] sm:$0xff]
          %v1435 = vld [vmem:[#allocation5 + $0x58] sm:$0xff]
          %v1436 = vld [vmem:[#allocation5 + $0x60] sm:$0xff]
          %v1437 = vld [vmem:[#allocation5 + $0x68] sm:$0xff]
          %v1438 = vld [vmem:[#allocation5 + $0x70] sm:$0xff]
          %v1439 = vld [vmem:[#allocation5 + $0x78] sm:$0xff]
          %v1441 = vlaneseq
          %v1442 = vshrl.u32 %v1441, 7
          %v1443 = vsub.s32 0, %v1442
          %v1444 = vrot.slane %v1423, %v1443
          %v1445 = vlaneseq
          %v1446 = vshrl.u32 %v1445, 7
          %v1447 = vsub.s32 1, %v1446
          %v1448 = vrot.slane %v1423, %v1447
          %v1451 = vmul.f32 %v1424, %v1444
          %v1452 = vmul.f32 %v1425, %v1448
          %v1453 = vmul.f32 %v1426, %v1444
          %v1454 = vmul.f32 %v1427, %v1448
          %v1455 = vmul.f32 %v1428, %v1444
          %v1456 = vmul.f32 %v1429, %v1448
          %v1457 = vmul.f32 %v1430, %v1444
          %v1458 = vmul.f32 %v1431, %v1448
          %v1459 = vmul.f32 %v1432, %v1444
          %v1460 = vmul.f32 %v1433, %v1448
          %v1461 = vmul.f32 %v1434, %v1444
          %v1462 = vmul.f32 %v1435, %v1448
          %v1463 = vmul.f32 %v1436, %v1444
          %v1464 = vmul.f32 %v1437, %v1448
          %v1465 = vmul.f32 %v1438, %v1444
          %v1466 = vmul.f32 %v1439, %v1448
          %s1467 = sld [smem:[#allocation6]]
          %v1468 = vstv %s1467
          %v1469 = vmul.f32 %v1468, %v1451
          %v1470 = vmul.f32 %v1468, %v1452
          %v1471 = vmul.f32 %v1468, %v1453
          %v1472 = vmul.f32 %v1468, %v1454
          %v1473 = vmul.f32 %v1468, %v1455
          %v1474 = vmul.f32 %v1468, %v1456
          %v1475 = vmul.f32 %v1468, %v1457
          %v1476 = vmul.f32 %v1468, %v1458
          %v1477 = vmul.f32 %v1468, %v1459
          %v1478 = vmul.f32 %v1468, %v1460
          %v1479 = vmul.f32 %v1468, %v1461
          %v1480 = vmul.f32 %v1468, %v1462
          %v1481 = vmul.f32 %v1468, %v1463
          %v1482 = vmul.f32 %v1468, %v1464
          %v1483 = vmul.f32 %v1468, %v1465
          %v1484 = vmul.f32 %v1468, %v1466
          %v1485 = vadd.f32 %v1469, %v384
          %v1486 = vadd.f32 %v1470, %v385
          %v1487 = vadd.f32 %v1471, %v386
          %v1488 = vadd.f32 %v1472, %v387
          %v1489 = vadd.f32 %v1473, %v388
          %v1490 = vadd.f32 %v1474, %v389
          %v1491 = vadd.f32 %v1475, %v390
          %v1492 = vadd.f32 %v1476, %v391
          %v1493 = vadd.f32 %v1477, %v392
          %v1494 = vadd.f32 %v1478, %v393
          %v1495 = vadd.f32 %v1479, %v394
          %v1496 = vadd.f32 %v1480, %v395
          %v1497 = vadd.f32 %v1481, %v396
          %v1498 = vadd.f32 %v1482, %v397
          %v1499 = vadd.f32 %v1483, %v398
          %v1500 = vadd.f32 %v1484, %v399
          %1501 = vst [vmem:[%s378] sm:$0xff] %v1485
          %1502 = vst [vmem:[%s378 + $0x8] sm:$0xff] %v1486
          %1503 = vst [vmem:[%s378 + $0x10] sm:$0xff] %v1487
          %1504 = vst [vmem:[%s378 + $0x18] sm:$0xff] %v1488
          %1505 = vst [vmem:[%s378 + $0x20] sm:$0xff] %v1489
          %1506 = vst [vmem:[%s378 + $0x28] sm:$0xff] %v1490
          %1507 = vst [vmem:[%s378 + $0x30] sm:$0xff] %v1491
          %1508 = vst [vmem:[%s378 + $0x38] sm:$0xff] %v1492
          %1509 = vst [vmem:[%s378 + $0x40] sm:$0xff] %v1493
          %1510 = vst [vmem:[%s378 + $0x48] sm:$0xff] %v1494
          %1511 = vst [vmem:[%s378 + $0x50] sm:$0xff] %v1495
          %1512 = vst [vmem:[%s378 + $0x58] sm:$0xff] %v1496
          %1513 = vst [vmem:[%s378 + $0x60] sm:$0xff] %v1497
          %1514 = vst [vmem:[%s378 + $0x68] sm:$0xff] %v1498
          %1515 = vst [vmem:[%s378 + $0x70] sm:$0xff] %v1499
          %1516 = vst [vmem:[%s378 + $0x78] sm:$0xff] %v1500
        $region64: #{tpu_custom_call.1} parent=43 // pred_fallthru
          _
        %s1517 = sand.u32 %s203, 1
        %s1518 = scalar_lea.sflag [#allocation9], %s1517
        %s1519 = sand.u32 %s203, 1
        %s1520 = smul.addr %s1519, 128
        %s1521 = scalar_lea.vmem [#allocation13], %s1520
        // Predicated region
        $region65: #{tpu_custom_call.1} parent=43 // pred_check
          %p1522 = pneg %p213
        $region66: #{tpu_custom_call.1} parent=43 // pred_check_branch
          %1524 = sbr.rel (%p1522) target = $region68
        $region67: #{tpu_custom_call.1} parent=43 // pred_region
          %s1525 = smul.u32 2, %s33
          %s1527 = ssub.s32 2048, 2048
          %1528 = vsyncadd %s1518, %s1527
          %s1529 = smul.addr %s32, 16
          %s1530 = sadd.s32 %s1525, %s1529
          %s1531 = smul.addr %s1530, 128
          %s1532 = scalar_lea.hbm %s6, %s1531
          %s1533 = sshll.u32 %s1521, 4
          %s1534 = int_to_ptr.vmem [resolvable:$true] %s1533
          %1539 = dma.vmem_to_hbm [thread:$0]  %s1534, 2048, %s1532, %s1518, 256, 256, 16
        $region68: #{tpu_custom_call.1} parent=43 // pred_fallthru
          _
      $region44: #{tpu_custom_call.1} parent=5 // pred_fallthru
        _
      %p1540 = scmp.le.s32.totalorder 2, %s22
      // Predicated region
      $region69: #{tpu_custom_call.1} parent=5 // pred_check
        %p1541 = pneg %p1540
      $region70: #{tpu_custom_call.1} parent=5 // pred_check_branch
        %1543 = sbr.rel (%p1541) target = $region72
      $region71: #{tpu_custom_call.1} parent=5 // pred_region
        %s1544 = ssub.s32 %s22, 2
        // Predicated region
        $region73: #{tpu_custom_call.1} parent=71 // pred_check
          %p1545 = pneg %p219
        $region74: #{tpu_custom_call.1} parent=71 // pred_check_branch
          %1547 = sbr.rel (%p1545) target = $region76
        $region75: #{tpu_custom_call.1} parent=71 // pred_region
          %s1548 = sand.u32 %s204, 1
          %s1549 = scalar_lea.sflag [#allocation9], %s1548
          %s1550 = sand.u32 %s204, 1
          %s1551 = smul.addr %s1550, 128
          %s1552 = scalar_lea.vmem [#allocation13], %s1551
          %1553 = dma.done %s1549, 2048
        $region76: #{tpu_custom_call.1} parent=71 // pred_fallthru
          _
      $region72: #{tpu_custom_call.1} parent=5 // pred_fallthru
        _
    $region6: #{tpu_custom_call.1} parent=1 // loop_footer
      %s26 = sadd.s32 1, %s22
    $region7: #{tpu_custom_call.1} parent=1 // loop_footer_branch
      %21 = sbr.rel target = $region3
    $region8: #{tpu_custom_call.1} parent=1 // loop_exit
      _
    %1554 = vsyncpa [#allocation8], 1
    %s1555 = scalar_lea.sflag [#allocation8], 1
    %1556 = vsyncpa %s1555, 1
    %1557 = vsyncpa [#allocation11], 1
    %s1558 = scalar_lea.sflag [#allocation11], 1
    %1559 = vsyncpa %s1558, 1
    %1560 = vsyncpa [#allocation9], 1
    %s1561 = scalar_lea.sflag [#allocation9], 1
    %1562 = vsyncpa %s1561, 1

</llo_original>
